<compile_context>
chip_gen: v7x
topology: tpu7x:2x2x1
jax: 0.10.0
libtpu: 0.0.40
codegen_flags: <defaults>
</compile_context>

<pallas_src>
import jax
import jax.numpy as jnp
import numpy as np
from jax.experimental import pallas as pl
from jax.experimental.pallas import tpu as pltpu


def _rup8(n):
    return ((n + 7) // 8) * 8


def _sigmoid_eup(x):
    # sigmoid(x) = 0.5 * tanh(0.5 * x) + 0.5 : one EUP tanh + cheap VPU scale/add,
    # avoids the VALU divide an exp-based logistic expansion would need.
    return 0.5 * jnp.tanh(0.5 * x) + 0.5


def _make_gru_kernel(L, N, D_in, H, depth, offsets):
    W3 = 3 * H

    def kernel(x_ref, h0_ref, slab_ref, h_next_ref):
        # ---- static per-layer weight views out of the single packed slab ----
        wihT, whhT, gxb, ghb = [], [], [], []
        for l in range(depth):
            o = offsets[l]
            in_l = D_in if l == 0 else H
            wihT.append(slab_ref[o["ih"]:o["ih"] + in_l, :])          # (in_l, 3H)
            whhT.append(slab_ref[o["hh"]:o["hh"] + H, :])             # (H, 3H)
            # bias rows; broadcasts hoisted out of the recurrence
            if l > 0:
                gxb.append(jnp.broadcast_to(
                    slab_ref[o["b"]:o["b"] + 1, :], (N, W3)))         # r|z|n input-side
            else:
                gxb.append(None)                                      # folded into gx0
            ghb.append(jnp.broadcast_to(
                slab_ref[o["b"] + 1:o["b"] + 2, :], (N, W3)))         # [0 | 0 | b_hh_n]

        # ---- layer-0 input-side gates for ALL timesteps: one big MXU pass ----
        gx0 = (jnp.dot(x_ref[...], wihT[0], preferred_element_type=jnp.float32)
               + slab_ref[offsets[0]["b"]:offsets[0]["b"] + 1, :])     # (L*N, 3H)

        # ---- layer-skewed wavefront over the serial recurrence ----
        hs = [h0_ref[l] for l in range(depth)]          # per-layer carries (N, H)
        for s in range(L + depth - 1):                  # fully unrolled, static
            new = {}
            for l in range(depth):
                t = s - l
                if not (0 <= t < L):
                    continue
                if l == 0:
                    gx = gx0[t * N:(t + 1) * N, :]      # static row slice, lane-dense
                else:
                    # input = layer l-1's output at time t (committed last super-step)
                    gx = jnp.dot(hs[l - 1], wihT[l],
                                 preferred_element_type=jnp.float32) + gxb[l]
                gh = jnp.dot(hs[l], whhT[l],
                             preferred_element_type=jnp.float32) + ghb[l]
                rz = _sigmoid_eup(gx[:, :2 * H] + gh[:, :2 * H])       # fused r|z
                r = rz[:, :H]
                z = rz[:, H:]
                n = jnp.tanh(gx[:, 2 * H:] + r * gh[:, 2 * H:])        # gh_n carries b_hh_n
                new[l] = (1.0 - z) * n + z * hs[l]
            for l, v in new.items():                    # Jacobi-style commit
                hs[l] = v

        for l in range(depth):
            h_next_ref[l] = hs[l]

    return kernel


def pack_weight_slab(params, obs_dims, h_dims, depth):
    """Pack all per-layer GRU weights/biases into one lane-dense (R, 3H) f32 slab.

    Row blocks are 8-aligned so in-kernel static slices start on sublane tiles.
    Gate column order is torch's [r | z | n]. Per layer:
      rows [ih, ih+in_dim)  : W_ih^T
      rows [hh, hh+H)       : W_hh^T
      row  b                : [b_ih_r+b_hh_r | b_ih_z+b_hh_z | b_ih_n]  (adds to gx)
      row  b+1              : [0 | 0 | b_hh_n]                          (adds to gh)
    """
    H = h_dims
    W3 = 3 * H
    blocks, offsets, row = [], [], 0
    for layer, p in enumerate(params):
        in_dim = obs_dims if layer == 0 else H
        W_ih, W_hh = p["W_ih"], p["W_hh"]
        b_ih, b_hh = p["b_ih"], p["b_hh"]
        wihT = jnp.zeros((_rup8(in_dim), W3), jnp.float32).at[:in_dim].set(W_ih.T)
        whhT = jnp.zeros((_rup8(H), W3), jnp.float32).at[:H].set(W_hh.T)
        b_comb = jnp.concatenate(
            [b_ih[:2 * H] + b_hh[:2 * H], b_ih[2 * H:]]).reshape(1, W3)
        ghb = jnp.zeros((1, W3), jnp.float32).at[0, 2 * H:].set(b_hh[2 * H:])
        bias_blk = (jnp.zeros((8, W3), jnp.float32)
                    .at[0:1].set(b_comb).at[1:2].set(ghb))
        offsets.append(dict(ih=row,
                            hh=row + _rup8(in_dim),
                            b=row + _rup8(in_dim) + _rup8(H)))
        blocks += [wihT, whhT, bias_blk]
        row += _rup8(in_dim) + _rup8(H) + 8
    return jnp.concatenate(blocks, axis=0), offsets


def state_representation_forward(x, h0, slab, offsets):
    """x: (L, N, D_in) f32, h0: (depth, N, H) f32 -> (out_last (N,H), h_next (depth,N,H))."""
    L, N, D_in = x.shape
    depth, _, H = h0.shape
    x2d = x.reshape(L * N, D_in)          # contiguous reshape: free view in XLA
    vmem = pltpu.MemorySpace.VMEM
    h_next = pl.pallas_call(
        _make_gru_kernel(L, N, D_in, H, depth, offsets),
        out_shape=jax.ShapeDtypeStruct((depth, N, H), jnp.float32),
        in_specs=[pl.BlockSpec(memory_space=vmem)] * 3,
        out_specs=pl.BlockSpec(memory_space=vmem),
    )(x2d, h0, slab)
    out_last = h_next[depth - 1]          # out[-1] of top layer == its final carry
    return out_last, h_next


def init_gru_params(key, obs_dims, h_dims, depth):
    """Deterministic init mimicking torch.nn.GRU default U(-1/sqrt(H), 1/sqrt(H))."""
    k = 1.0 / np.sqrt(h_dims)
    params = []
    for layer in range(depth):
        in_dim = obs_dims if layer == 0 else h_dims
        key, k1, k2, k3, k4 = jax.random.split(key, 5)
        params.append(dict(
            W_ih=jax.random.uniform(k1, (3 * h_dims, in_dim), jnp.float32, -k, k),
            W_hh=jax.random.uniform(k2, (3 * h_dims, h_dims), jnp.float32, -k, k),
            b_ih=jax.random.uniform(k3, (3 * h_dims,), jnp.float32, -k, k),
            b_hh=jax.random.uniform(k4, (3 * h_dims,), jnp.float32, -k, k),
        ))
    return params


def gru_reference(x, h0, params, h_dims):
    """Pure-JAX reference matching torch.nn.GRU semantics (gate order r, z, n)."""
    H = h_dims
    L = x.shape[0]
    inp = x
    h_next = []
    for layer, p in enumerate(params):
        h = h0[layer]
        outs = []
        for t in range(L):
            gx = inp[t] @ p["W_ih"].T + p["b_ih"]
            gh = h @ p["W_hh"].T + p["b_hh"]
            r = jax.nn.sigmoid(gx[:, :H] + gh[:, :H])
            z = jax.nn.sigmoid(gx[:, H:2 * H] + gh[:, H:2 * H])
            n = jnp.tanh(gx[:, 2 * H:] + r * gh[:, 2 * H:])
            h = (1.0 - z) * n + z * h
            outs.append(h)
        inp = jnp.stack(outs)
        h_next.append(h)
    return inp[-1], jnp.stack(h_next)


if __name__ == "__main__":
    L, N = 8, 2            # sequence length, batch
    obs_dims, h_dims, depth = 4, 32, 2

    key = jax.random.PRNGKey(0)
    key, kx, kp = jax.random.split(key, 3)
    x = jax.random.normal(kx, (L, N, obs_dims), jnp.float32)
    h0 = jnp.zeros((depth, N, h_dims), jnp.float32)  # create_init_hidden_state('zeros')

    params = init_gru_params(kp, obs_dims, h_dims, depth)
    slab, offsets = pack_weight_slab(params, obs_dims, h_dims, depth)

    out_last, h_next = state_representation_forward(x, h0, slab, offsets)
    jax.block_until_ready((out_last, h_next))

    ref_out_last, ref_h_next = gru_reference(x, h0, params, h_dims)
    np.testing.assert_allclose(np.asarray(out_last), np.asarray(ref_out_last),
                               rtol=1e-5, atol=1e-5)
    np.testing.assert_allclose(np.asarray(h_next), np.asarray(ref_h_next),
                               rtol=1e-5, atol=1e-5)

    assert out_last.shape == (N, h_dims)
    assert h_next.shape == (depth, N, h_dims)
    print("KERNEL_OK")
</pallas_src>

<mosaic_0001>
module attributes {stable_mosaic.version = 11 : i64} {
  func.func @kernel(%arg0: memref<16x4xf32, #tpu.memory_space<vmem>>, %arg1: memref<2x2x32xf32, #tpu.memory_space<vmem>>, %arg2: memref<120x96xf32, #tpu.memory_space<vmem>>, %arg3: memref<2x2x32xf32, #tpu.memory_space<vmem>>) attributes {dimension_semantics = [], scalar_prefetch = 0 : i64, scratch_operands = 0 : i64, tpu.core_type = #tpu.core_type<tc>} {
    %c0 = arith.constant 0 : index
    %c0_0 = arith.constant 0 : index
    %0 = vector.load %arg2[%c0, %c0_0] : memref<120x96xf32, #tpu.memory_space<vmem>>, vector<4x96xf32>
    %c8 = arith.constant 8 : index
    %c0_1 = arith.constant 0 : index
    %1 = vector.load %arg2[%c8, %c0_1] : memref<120x96xf32, #tpu.memory_space<vmem>>, vector<32x96xf32>
    %c41 = arith.constant 41 : index
    %c0_2 = arith.constant 0 : index
    %2 = vector.load %arg2[%c41, %c0_2] : memref<120x96xf32, #tpu.memory_space<vmem>>, vector<1x96xf32>
    %3 = vector.shape_cast %2 : vector<1x96xf32> to vector<1x96xf32>
    %4 = vector.broadcast %3 : vector<1x96xf32> to vector<2x96xf32>
    %c48 = arith.constant 48 : index
    %c0_3 = arith.constant 0 : index
    %5 = vector.load %arg2[%c48, %c0_3] : memref<120x96xf32, #tpu.memory_space<vmem>>, vector<32x96xf32>
    %c80 = arith.constant 80 : index
    %c0_4 = arith.constant 0 : index
    %6 = vector.load %arg2[%c80, %c0_4] : memref<120x96xf32, #tpu.memory_space<vmem>>, vector<32x96xf32>
    %c112 = arith.constant 112 : index
    %c0_5 = arith.constant 0 : index
    %7 = vector.load %arg2[%c112, %c0_5] : memref<120x96xf32, #tpu.memory_space<vmem>>, vector<1x96xf32>
    %8 = vector.shape_cast %7 : vector<1x96xf32> to vector<1x96xf32>
    %9 = vector.broadcast %8 : vector<1x96xf32> to vector<2x96xf32>
    %c113 = arith.constant 113 : index
    %c0_6 = arith.constant 0 : index
    %10 = vector.load %arg2[%c113, %c0_6] : memref<120x96xf32, #tpu.memory_space<vmem>>, vector<1x96xf32>
    %11 = vector.shape_cast %10 : vector<1x96xf32> to vector<1x96xf32>
    %12 = vector.broadcast %11 : vector<1x96xf32> to vector<2x96xf32>
    %c0_7 = arith.constant 0 : index
    %c0_8 = arith.constant 0 : index
    %13 = vector.load %arg0[%c0_7, %c0_8] : memref<16x4xf32, #tpu.memory_space<vmem>>, vector<16x4xf32>
    %cst = arith.constant dense<0.000000e+00> : vector<16x96xf32>
    %14 = tpu.matmul %13, %0, %cst {dimension_numbers = #tpu.dot_dimension_numbers<[1], [0], [0], [1], [0, 0, 1, 1], [], []>} : vector<16x4xf32>, vector<4x96xf32>, vector<16x96xf32> -> vector<16x96xf32>
    %c40 = arith.constant 40 : index
    %c0_9 = arith.constant 0 : index
    %15 = vector.load %arg2[%c40, %c0_9] : memref<120x96xf32, #tpu.memory_space<vmem>>, vector<1x96xf32>
    %16 = vector.broadcast %15 : vector<1x96xf32> to vector<16x96xf32>
    %17 = arith.addf %14, %16 : vector<16x96xf32>
    %c0_10 = arith.constant 0 : index
    %c0_11 = arith.constant 0 : index
    %c0_12 = arith.constant 0 : index
    %18 = vector.load %arg1[%c0_10, %c0_11, %c0_12] : memref<2x2x32xf32, #tpu.memory_space<vmem>>, vector<1x2x32xf32>
    %19 = vector.shape_cast %18 : vector<1x2x32xf32> to vector<2x32xf32>
    %c1 = arith.constant 1 : index
    %c0_13 = arith.constant 0 : index
    %c0_14 = arith.constant 0 : index
    %20 = vector.load %arg1[%c1, %c0_13, %c0_14] : memref<2x2x32xf32, #tpu.memory_space<vmem>>, vector<1x2x32xf32>
    %21 = vector.shape_cast %20 : vector<1x2x32xf32> to vector<2x32xf32>
    %22 = vector.extract_strided_slice %17 {offsets = [0, 0], sizes = [2, 96], strides = [1, 1]} : vector<16x96xf32> to vector<2x96xf32>
    %cst_15 = arith.constant dense<0.000000e+00> : vector<2x96xf32>
    %23 = tpu.matmul %19, %1, %cst_15 {dimension_numbers = #tpu.dot_dimension_numbers<[1], [0], [0], [1], [0, 0, 1, 1], [], []>} : vector<2x32xf32>, vector<32x96xf32>, vector<2x96xf32> -> vector<2x96xf32>
    %24 = arith.addf %23, %4 : vector<2x96xf32>
    %25 = vector.extract_strided_slice %22 {offsets = [0, 0], sizes = [2, 64], strides = [1, 1]} : vector<2x96xf32> to vector<2x64xf32>
    %26 = vector.extract_strided_slice %24 {offsets = [0, 0], sizes = [2, 64], strides = [1, 1]} : vector<2x96xf32> to vector<2x64xf32>
    %27 = arith.addf %25, %26 : vector<2x64xf32>
    %cst_16 = arith.constant 5.000000e-01 : f32
    %28 = vector.broadcast %cst_16 : f32 to vector<2x64xf32>
    %29 = arith.mulf %28, %27 : vector<2x64xf32>
    %30 = math.tanh %29 : vector<2x64xf32>
    %cst_17 = arith.constant 5.000000e-01 : f32
    %31 = vector.broadcast %cst_17 : f32 to vector<2x64xf32>
    %32 = arith.mulf %31, %30 : vector<2x64xf32>
    %cst_18 = arith.constant 5.000000e-01 : f32
    %33 = vector.broadcast %cst_18 : f32 to vector<2x64xf32>
    %34 = arith.addf %32, %33 : vector<2x64xf32>
    %35 = vector.extract_strided_slice %34 {offsets = [0, 0], sizes = [2, 32], strides = [1, 1]} : vector<2x64xf32> to vector<2x32xf32>
    %36 = vector.extract_strided_slice %34 {offsets = [0, 32], sizes = [2, 32], strides = [1, 1]} : vector<2x64xf32> to vector<2x32xf32>
    %37 = vector.extract_strided_slice %22 {offsets = [0, 64], sizes = [2, 32], strides = [1, 1]} : vector<2x96xf32> to vector<2x32xf32>
    %38 = vector.extract_strided_slice %24 {offsets = [0, 64], sizes = [2, 32], strides = [1, 1]} : vector<2x96xf32> to vector<2x32xf32>
    %39 = arith.mulf %35, %38 : vector<2x32xf32>
    %40 = arith.addf %37, %39 : vector<2x32xf32>
    %41 = math.tanh %40 : vector<2x32xf32>
    %cst_19 = arith.constant 1.000000e+00 : f32
    %42 = vector.broadcast %cst_19 : f32 to vector<2x32xf32>
    %43 = arith.subf %42, %36 : vector<2x32xf32>
    %44 = arith.mulf %43, %41 : vector<2x32xf32>
    %45 = arith.mulf %36, %19 : vector<2x32xf32>
    %46 = arith.addf %44, %45 : vector<2x32xf32>
    %47 = vector.extract_strided_slice %17 {offsets = [2, 0], sizes = [2, 96], strides = [1, 1]} : vector<16x96xf32> to vector<2x96xf32>
    %cst_20 = arith.constant dense<0.000000e+00> : vector<2x96xf32>
    %48 = tpu.matmul %46, %1, %cst_20 {dimension_numbers = #tpu.dot_dimension_numbers<[1], [0], [0], [1], [0, 0, 1, 1], [], []>} : vector<2x32xf32>, vector<32x96xf32>, vector<2x96xf32> -> vector<2x96xf32>
    %49 = arith.addf %48, %4 : vector<2x96xf32>
    %50 = vector.extract_strided_slice %47 {offsets = [0, 0], sizes = [2, 64], strides = [1, 1]} : vector<2x96xf32> to vector<2x64xf32>
    %51 = vector.extract_strided_slice %49 {offsets = [0, 0], sizes = [2, 64], strides = [1, 1]} : vector<2x96xf32> to vector<2x64xf32>
    %52 = arith.addf %50, %51 : vector<2x64xf32>
    %cst_21 = arith.constant 5.000000e-01 : f32
    %53 = vector.broadcast %cst_21 : f32 to vector<2x64xf32>
    %54 = arith.mulf %53, %52 : vector<2x64xf32>
    %55 = math.tanh %54 : vector<2x64xf32>
    %cst_22 = arith.constant 5.000000e-01 : f32
    %56 = vector.broadcast %cst_22 : f32 to vector<2x64xf32>
    %57 = arith.mulf %56, %55 : vector<2x64xf32>
    %cst_23 = arith.constant 5.000000e-01 : f32
    %58 = vector.broadcast %cst_23 : f32 to vector<2x64xf32>
    %59 = arith.addf %57, %58 : vector<2x64xf32>
    %60 = vector.extract_strided_slice %59 {offsets = [0, 0], sizes = [2, 32], strides = [1, 1]} : vector<2x64xf32> to vector<2x32xf32>
    %61 = vector.extract_strided_slice %59 {offsets = [0, 32], sizes = [2, 32], strides = [1, 1]} : vector<2x64xf32> to vector<2x32xf32>
    %62 = vector.extract_strided_slice %47 {offsets = [0, 64], sizes = [2, 32], strides = [1, 1]} : vector<2x96xf32> to vector<2x32xf32>
    %63 = vector.extract_strided_slice %49 {offsets = [0, 64], sizes = [2, 32], strides = [1, 1]} : vector<2x96xf32> to vector<2x32xf32>
    %64 = arith.mulf %60, %63 : vector<2x32xf32>
    %65 = arith.addf %62, %64 : vector<2x32xf32>
    %66 = math.tanh %65 : vector<2x32xf32>
    %cst_24 = arith.constant 1.000000e+00 : f32
    %67 = vector.broadcast %cst_24 : f32 to vector<2x32xf32>
    %68 = arith.subf %67, %61 : vector<2x32xf32>
    %69 = arith.mulf %68, %66 : vector<2x32xf32>
    %70 = arith.mulf %61, %46 : vector<2x32xf32>
    %71 = arith.addf %69, %70 : vector<2x32xf32>
    %cst_25 = arith.constant dense<0.000000e+00> : vector<2x96xf32>
    %72 = tpu.matmul %46, %5, %cst_25 {dimension_numbers = #tpu.dot_dimension_numbers<[1], [0], [0], [1], [0, 0, 1, 1], [], []>} : vector<2x32xf32>, vector<32x96xf32>, vector<2x96xf32> -> vector<2x96xf32>
    %73 = arith.addf %72, %9 : vector<2x96xf32>
    %cst_26 = arith.constant dense<0.000000e+00> : vector<2x96xf32>
    %74 = tpu.matmul %21, %6, %cst_26 {dimension_numbers = #tpu.dot_dimension_numbers<[1], [0], [0], [1], [0, 0, 1, 1], [], []>} : vector<2x32xf32>, vector<32x96xf32>, vector<2x96xf32> -> vector<2x96xf32>
    %75 = arith.addf %74, %12 : vector<2x96xf32>
    %76 = vector.extract_strided_slice %73 {offsets = [0, 0], sizes = [2, 64], strides = [1, 1]} : vector<2x96xf32> to vector<2x64xf32>
    %77 = vector.extract_strided_slice %75 {offsets = [0, 0], sizes = [2, 64], strides = [1, 1]} : vector<2x96xf32> to vector<2x64xf32>
    %78 = arith.addf %76, %77 : vector<2x64xf32>
    %cst_27 = arith.constant 5.000000e-01 : f32
    %79 = vector.broadcast %cst_27 : f32 to vector<2x64xf32>
    %80 = arith.mulf %79, %78 : vector<2x64xf32>
    %81 = math.tanh %80 : vector<2x64xf32>
    %cst_28 = arith.constant 5.000000e-01 : f32
    %82 = vector.broadcast %cst_28 : f32 to vector<2x64xf32>
    %83 = arith.mulf %82, %81 : vector<2x64xf32>
    %cst_29 = arith.constant 5.000000e-01 : f32
    %84 = vector.broadcast %cst_29 : f32 to vector<2x64xf32>
    %85 = arith.addf %83, %84 : vector<2x64xf32>
    %86 = vector.extract_strided_slice %85 {offsets = [0, 0], sizes = [2, 32], strides = [1, 1]} : vector<2x64xf32> to vector<2x32xf32>
    %87 = vector.extract_strided_slice %85 {offsets = [0, 32], sizes = [2, 32], strides = [1, 1]} : vector<2x64xf32> to vector<2x32xf32>
    %88 = vector.extract_strided_slice %73 {offsets = [0, 64], sizes = [2, 32], strides = [1, 1]} : vector<2x96xf32> to vector<2x32xf32>
    %89 = vector.extract_strided_slice %75 {offsets = [0, 64], sizes = [2, 32], strides = [1, 1]} : vector<2x96xf32> to vector<2x32xf32>
    %90 = arith.mulf %86, %89 : vector<2x32xf32>
    %91 = arith.addf %88, %90 : vector<2x32xf32>
    %92 = math.tanh %91 : vector<2x32xf32>
    %cst_30 = arith.constant 1.000000e+00 : f32
    %93 = vector.broadcast %cst_30 : f32 to vector<2x32xf32>
    %94 = arith.subf %93, %87 : vector<2x32xf32>
    %95 = arith.mulf %94, %92 : vector<2x32xf32>
    %96 = arith.mulf %87, %21 : vector<2x32xf32>
    %97 = arith.addf %95, %96 : vector<2x32xf32>
    %98 = vector.extract_strided_slice %17 {offsets = [4, 0], sizes = [2, 96], strides = [1, 1]} : vector<16x96xf32> to vector<2x96xf32>
    %cst_31 = arith.constant dense<0.000000e+00> : vector<2x96xf32>
    %99 = tpu.matmul %71, %1, %cst_31 {dimension_numbers = #tpu.dot_dimension_numbers<[1], [0], [0], [1], [0, 0, 1, 1], [], []>} : vector<2x32xf32>, vector<32x96xf32>, vector<2x96xf32> -> vector<2x96xf32>
    %100 = arith.addf %99, %4 : vector<2x96xf32>
    %101 = vector.extract_strided_slice %98 {offsets = [0, 0], sizes = [2, 64], strides = [1, 1]} : vector<2x96xf32> to vector<2x64xf32>
    %102 = vector.extract_strided_slice %100 {offsets = [0, 0], sizes = [2, 64], strides = [1, 1]} : vector<2x96xf32> to vector<2x64xf32>
    %103 = arith.addf %101, %102 : vector<2x64xf32>
    %cst_32 = arith.constant 5.000000e-01 : f32
    %104 = vector.broadcast %cst_32 : f32 to vector<2x64xf32>
    %105 = arith.mulf %104, %103 : vector<2x64xf32>
    %106 = math.tanh %105 : vector<2x64xf32>
    %cst_33 = arith.constant 5.000000e-01 : f32
    %107 = vector.broadcast %cst_33 : f32 to vector<2x64xf32>
    %108 = arith.mulf %107, %106 : vector<2x64xf32>
    %cst_34 = arith.constant 5.000000e-01 : f32
    %109 = vector.broadcast %cst_34 : f32 to vector<2x64xf32>
    %110 = arith.addf %108, %109 : vector<2x64xf32>
    %111 = vector.extract_strided_slice %110 {offsets = [0, 0], sizes = [2, 32], strides = [1, 1]} : vector<2x64xf32> to vector<2x32xf32>
    %112 = vector.extract_strided_slice %110 {offsets = [0, 32], sizes = [2, 32], strides = [1, 1]} : vector<2x64xf32> to vector<2x32xf32>
    %113 = vector.extract_strided_slice %98 {offsets = [0, 64], sizes = [2, 32], strides = [1, 1]} : vector<2x96xf32> to vector<2x32xf32>
    %114 = vector.extract_strided_slice %100 {offsets = [0, 64], sizes = [2, 32], strides = [1, 1]} : vector<2x96xf32> to vector<2x32xf32>
    %115 = arith.mulf %111, %114 : vector<2x32xf32>
    %116 = arith.addf %113, %115 : vector<2x32xf32>
    %117 = math.tanh %116 : vector<2x32xf32>
    %cst_35 = arith.constant 1.000000e+00 : f32
    %118 = vector.broadcast %cst_35 : f32 to vector<2x32xf32>
    %119 = arith.subf %118, %112 : vector<2x32xf32>
    %120 = arith.mulf %119, %117 : vector<2x32xf32>
    %121 = arith.mulf %112, %71 : vector<2x32xf32>
    %122 = arith.addf %120, %121 : vector<2x32xf32>
    %cst_36 = arith.constant dense<0.000000e+00> : vector<2x96xf32>
    %123 = tpu.matmul %71, %5, %cst_36 {dimension_numbers = #tpu.dot_dimension_numbers<[1], [0], [0], [1], [0, 0, 1, 1], [], []>} : vector<2x32xf32>, vector<32x96xf32>, vector<2x96xf32> -> vector<2x96xf32>
    %124 = arith.addf %123, %9 : vector<2x96xf32>
    %cst_37 = arith.constant dense<0.000000e+00> : vector<2x96xf32>
    %125 = tpu.matmul %97, %6, %cst_37 {dimension_numbers = #tpu.dot_dimension_numbers<[1], [0], [0], [1], [0, 0, 1, 1], [], []>} : vector<2x32xf32>, vector<32x96xf32>, vector<2x96xf32> -> vector<2x96xf32>
    %126 = arith.addf %125, %12 : vector<2x96xf32>
    %127 = vector.extract_strided_slice %124 {offsets = [0, 0], sizes = [2, 64], strides = [1, 1]} : vector<2x96xf32> to vector<2x64xf32>
    %128 = vector.extract_strided_slice %126 {offsets = [0, 0], sizes = [2, 64], strides = [1, 1]} : vector<2x96xf32> to vector<2x64xf32>
    %129 = arith.addf %127, %128 : vector<2x64xf32>
    %cst_38 = arith.constant 5.000000e-01 : f32
    %130 = vector.broadcast %cst_38 : f32 to vector<2x64xf32>
    %131 = arith.mulf %130, %129 : vector<2x64xf32>
    %132 = math.tanh %131 : vector<2x64xf32>
    %cst_39 = arith.constant 5.000000e-01 : f32
    %133 = vector.broadcast %cst_39 : f32 to vector<2x64xf32>
    %134 = arith.mulf %133, %132 : vector<2x64xf32>
    %cst_40 = arith.constant 5.000000e-01 : f32
    %135 = vector.broadcast %cst_40 : f32 to vector<2x64xf32>
    %136 = arith.addf %134, %135 : vector<2x64xf32>
    %137 = vector.extract_strided_slice %136 {offsets = [0, 0], sizes = [2, 32], strides = [1, 1]} : vector<2x64xf32> to vector<2x32xf32>
    %138 = vector.extract_strided_slice %136 {offsets = [0, 32], sizes = [2, 32], strides = [1, 1]} : vector<2x64xf32> to vector<2x32xf32>
    %139 = vector.extract_strided_slice %124 {offsets = [0, 64], sizes = [2, 32], strides = [1, 1]} : vector<2x96xf32> to vector<2x32xf32>
    %140 = vector.extract_strided_slice %126 {offsets = [0, 64], sizes = [2, 32], strides = [1, 1]} : vector<2x96xf32> to vector<2x32xf32>
    %141 = arith.mulf %137, %140 : vector<2x32xf32>
    %142 = arith.addf %139, %141 : vector<2x32xf32>
    %143 = math.tanh %142 : vector<2x32xf32>
    %cst_41 = arith.constant 1.000000e+00 : f32
    %144 = vector.broadcast %cst_41 : f32 to vector<2x32xf32>
    %145 = arith.subf %144, %138 : vector<2x32xf32>
    %146 = arith.mulf %145, %143 : vector<2x32xf32>
    %147 = arith.mulf %138, %97 : vector<2x32xf32>
    %148 = arith.addf %146, %147 : vector<2x32xf32>
    %149 = vector.extract_strided_slice %17 {offsets = [6, 0], sizes = [2, 96], strides = [1, 1]} : vector<16x96xf32> to vector<2x96xf32>
    %cst_42 = arith.constant dense<0.000000e+00> : vector<2x96xf32>
    %150 = tpu.matmul %122, %1, %cst_42 {dimension_numbers = #tpu.dot_dimension_numbers<[1], [0], [0], [1], [0, 0, 1, 1], [], []>} : vector<2x32xf32>, vector<32x96xf32>, vector<2x96xf32> -> vector<2x96xf32>
    %151 = arith.addf %150, %4 : vector<2x96xf32>
    %152 = vector.extract_strided_slice %149 {offsets = [0, 0], sizes = [2, 64], strides = [1, 1]} : vector<2x96xf32> to vector<2x64xf32>
    %153 = vector.extract_strided_slice %151 {offsets = [0, 0], sizes = [2, 64], strides = [1, 1]} : vector<2x96xf32> to vector<2x64xf32>
    %154 = arith.addf %152, %153 : vector<2x64xf32>
    %cst_43 = arith.constant 5.000000e-01 : f32
    %155 = vector.broadcast %cst_43 : f32 to vector<2x64xf32>
    %156 = arith.mulf %155, %154 : vector<2x64xf32>
    %157 = math.tanh %156 : vector<2x64xf32>
    %cst_44 = arith.constant 5.000000e-01 : f32
    %158 = vector.broadcast %cst_44 : f32 to vector<2x64xf32>
    %159 = arith.mulf %158, %157 : vector<2x64xf32>
    %cst_45 = arith.constant 5.000000e-01 : f32
    %160 = vector.broadcast %cst_45 : f32 to vector<2x64xf32>
    %161 = arith.addf %159, %160 : vector<2x64xf32>
    %162 = vector.extract_strided_slice %161 {offsets = [0, 0], sizes = [2, 32], strides = [1, 1]} : vector<2x64xf32> to vector<2x32xf32>
    %163 = vector.extract_strided_slice %161 {offsets = [0, 32], sizes = [2, 32], strides = [1, 1]} : vector<2x64xf32> to vector<2x32xf32>
    %164 = vector.extract_strided_slice %149 {offsets = [0, 64], sizes = [2, 32], strides = [1, 1]} : vector<2x96xf32> to vector<2x32xf32>
    %165 = vector.extract_strided_slice %151 {offsets = [0, 64], sizes = [2, 32], strides = [1, 1]} : vector<2x96xf32> to vector<2x32xf32>
    %166 = arith.mulf %162, %165 : vector<2x32xf32>
    %167 = arith.addf %164, %166 : vector<2x32xf32>
    %168 = math.tanh %167 : vector<2x32xf32>
    %cst_46 = arith.constant 1.000000e+00 : f32
    %169 = vector.broadcast %cst_46 : f32 to vector<2x32xf32>
    %170 = arith.subf %169, %163 : vector<2x32xf32>
    %171 = arith.mulf %170, %168 : vector<2x32xf32>
    %172 = arith.mulf %163, %122 : vector<2x32xf32>
    %173 = arith.addf %171, %172 : vector<2x32xf32>
    %cst_47 = arith.constant dense<0.000000e+00> : vector<2x96xf32>
    %174 = tpu.matmul %122, %5, %cst_47 {dimension_numbers = #tpu.dot_dimension_numbers<[1], [0], [0], [1], [0, 0, 1, 1], [], []>} : vector<2x32xf32>, vector<32x96xf32>, vector<2x96xf32> -> vector<2x96xf32>
    %175 = arith.addf %174, %9 : vector<2x96xf32>
    %cst_48 = arith.constant dense<0.000000e+00> : vector<2x96xf32>
    %176 = tpu.matmul %148, %6, %cst_48 {dimension_numbers = #tpu.dot_dimension_numbers<[1], [0], [0], [1], [0, 0, 1, 1], [], []>} : vector<2x32xf32>, vector<32x96xf32>, vector<2x96xf32> -> vector<2x96xf32>
    %177 = arith.addf %176, %12 : vector<2x96xf32>
    %178 = vector.extract_strided_slice %175 {offsets = [0, 0], sizes = [2, 64], strides = [1, 1]} : vector<2x96xf32> to vector<2x64xf32>
    %179 = vector.extract_strided_slice %177 {offsets = [0, 0], sizes = [2, 64], strides = [1, 1]} : vector<2x96xf32> to vector<2x64xf32>
    %180 = arith.addf %178, %179 : vector<2x64xf32>
    %cst_49 = arith.constant 5.000000e-01 : f32
    %181 = vector.broadcast %cst_49 : f32 to vector<2x64xf32>
    %182 = arith.mulf %181, %180 : vector<2x64xf32>
    %183 = math.tanh %182 : vector<2x64xf32>
    %cst_50 = arith.constant 5.000000e-01 : f32
    %184 = vector.broadcast %cst_50 : f32 to vector<2x64xf32>
    %185 = arith.mulf %184, %183 : vector<2x64xf32>
    %cst_51 = arith.constant 5.000000e-01 : f32
    %186 = vector.broadcast %cst_51 : f32 to vector<2x64xf32>
    %187 = arith.addf %185, %186 : vector<2x64xf32>
    %188 = vector.extract_strided_slice %187 {offsets = [0, 0], sizes = [2, 32], strides = [1, 1]} : vector<2x64xf32> to vector<2x32xf32>
    %189 = vector.extract_strided_slice %187 {offsets = [0, 32], sizes = [2, 32], strides = [1, 1]} : vector<2x64xf32> to vector<2x32xf32>
    %190 = vector.extract_strided_slice %175 {offsets = [0, 64], sizes = [2, 32], strides = [1, 1]} : vector<2x96xf32> to vector<2x32xf32>
    %191 = vector.extract_strided_slice %177 {offsets = [0, 64], sizes = [2, 32], strides = [1, 1]} : vector<2x96xf32> to vector<2x32xf32>
    %192 = arith.mulf %188, %191 : vector<2x32xf32>
    %193 = arith.addf %190, %192 : vector<2x32xf32>
    %194 = math.tanh %193 : vector<2x32xf32>
    %cst_52 = arith.constant 1.000000e+00 : f32
    %195 = vector.broadcast %cst_52 : f32 to vector<2x32xf32>
    %196 = arith.subf %195, %189 : vector<2x32xf32>
    %197 = arith.mulf %196, %194 : vector<2x32xf32>
    %198 = arith.mulf %189, %148 : vector<2x32xf32>
    %199 = arith.addf %197, %198 : vector<2x32xf32>
    %200 = vector.extract_strided_slice %17 {offsets = [8, 0], sizes = [2, 96], strides = [1, 1]} : vector<16x96xf32> to vector<2x96xf32>
    %cst_53 = arith.constant dense<0.000000e+00> : vector<2x96xf32>
    %201 = tpu.matmul %173, %1, %cst_53 {dimension_numbers = #tpu.dot_dimension_numbers<[1], [0], [0], [1], [0, 0, 1, 1], [], []>} : vector<2x32xf32>, vector<32x96xf32>, vector<2x96xf32> -> vector<2x96xf32>
    %202 = arith.addf %201, %4 : vector<2x96xf32>
    %203 = vector.extract_strided_slice %200 {offsets = [0, 0], sizes = [2, 64], strides = [1, 1]} : vector<2x96xf32> to vector<2x64xf32>
    %204 = vector.extract_strided_slice %202 {offsets = [0, 0], sizes = [2, 64], strides = [1, 1]} : vector<2x96xf32> to vector<2x64xf32>
    %205 = arith.addf %203, %204 : vector<2x64xf32>
    %cst_54 = arith.constant 5.000000e-01 : f32
    %206 = vector.broadcast %cst_54 : f32 to vector<2x64xf32>
    %207 = arith.mulf %206, %205 : vector<2x64xf32>
    %208 = math.tanh %207 : vector<2x64xf32>
    %cst_55 = arith.constant 5.000000e-01 : f32
    %209 = vector.broadcast %cst_55 : f32 to vector<2x64xf32>
    %210 = arith.mulf %209, %208 : vector<2x64xf32>
    %cst_56 = arith.constant 5.000000e-01 : f32
    %211 = vector.broadcast %cst_56 : f32 to vector<2x64xf32>
    %212 = arith.addf %210, %211 : vector<2x64xf32>
    %213 = vector.extract_strided_slice %212 {offsets = [0, 0], sizes = [2, 32], strides = [1, 1]} : vector<2x64xf32> to vector<2x32xf32>
    %214 = vector.extract_strided_slice %212 {offsets = [0, 32], sizes = [2, 32], strides = [1, 1]} : vector<2x64xf32> to vector<2x32xf32>
    %215 = vector.extract_strided_slice %200 {offsets = [0, 64], sizes = [2, 32], strides = [1, 1]} : vector<2x96xf32> to vector<2x32xf32>
    %216 = vector.extract_strided_slice %202 {offsets = [0, 64], sizes = [2, 32], strides = [1, 1]} : vector<2x96xf32> to vector<2x32xf32>
    %217 = arith.mulf %213, %216 : vector<2x32xf32>
    %218 = arith.addf %215, %217 : vector<2x32xf32>
    %219 = math.tanh %218 : vector<2x32xf32>
    %cst_57 = arith.constant 1.000000e+00 : f32
    %220 = vector.broadcast %cst_57 : f32 to vector<2x32xf32>
    %221 = arith.subf %220, %214 : vector<2x32xf32>
    %222 = arith.mulf %221, %219 : vector<2x32xf32>
    %223 = arith.mulf %214, %173 : vector<2x32xf32>
    %224 = arith.addf %222, %223 : vector<2x32xf32>
    %cst_58 = arith.constant dense<0.000000e+00> : vector<2x96xf32>
    %225 = tpu.matmul %173, %5, %cst_58 {dimension_numbers = #tpu.dot_dimension_numbers<[1], [0], [0], [1], [0, 0, 1, 1], [], []>} : vector<2x32xf32>, vector<32x96xf32>, vector<2x96xf32> -> vector<2x96xf32>
    %226 = arith.addf %225, %9 : vector<2x96xf32>
    %cst_59 = arith.constant dense<0.000000e+00> : vector<2x96xf32>
    %227 = tpu.matmul %199, %6, %cst_59 {dimension_numbers = #tpu.dot_dimension_numbers<[1], [0], [0], [1], [0, 0, 1, 1], [], []>} : vector<2x32xf32>, vector<32x96xf32>, vector<2x96xf32> -> vector<2x96xf32>
    %228 = arith.addf %227, %12 : vector<2x96xf32>
    %229 = vector.extract_strided_slice %226 {offsets = [0, 0], sizes = [2, 64], strides = [1, 1]} : vector<2x96xf32> to vector<2x64xf32>
    %230 = vector.extract_strided_slice %228 {offsets = [0, 0], sizes = [2, 64], strides = [1, 1]} : vector<2x96xf32> to vector<2x64xf32>
    %231 = arith.addf %229, %230 : vector<2x64xf32>
    %cst_60 = arith.constant 5.000000e-01 : f32
    %232 = vector.broadcast %cst_60 : f32 to vector<2x64xf32>
    %233 = arith.mulf %232, %231 : vector<2x64xf32>
    %234 = math.tanh %233 : vector<2x64xf32>
    %cst_61 = arith.constant 5.000000e-01 : f32
    %235 = vector.broadcast %cst_61 : f32 to vector<2x64xf32>
    %236 = arith.mulf %235, %234 : vector<2x64xf32>
    %cst_62 = arith.constant 5.000000e-01 : f32
    %237 = vector.broadcast %cst_62 : f32 to vector<2x64xf32>
    %238 = arith.addf %236, %237 : vector<2x64xf32>
    %239 = vector.extract_strided_slice %238 {offsets = [0, 0], sizes = [2, 32], strides = [1, 1]} : vector<2x64xf32> to vector<2x32xf32>
    %240 = vector.extract_strided_slice %238 {offsets = [0, 32], sizes = [2, 32], strides = [1, 1]} : vector<2x64xf32> to vector<2x32xf32>
    %241 = vector.extract_strided_slice %226 {offsets = [0, 64], sizes = [2, 32], strides = [1, 1]} : vector<2x96xf32> to vector<2x32xf32>
    %242 = vector.extract_strided_slice %228 {offsets = [0, 64], sizes = [2, 32], strides = [1, 1]} : vector<2x96xf32> to vector<2x32xf32>
    %243 = arith.mulf %239, %242 : vector<2x32xf32>
    %244 = arith.addf %241, %243 : vector<2x32xf32>
    %245 = math.tanh %244 : vector<2x32xf32>
    %cst_63 = arith.constant 1.000000e+00 : f32
    %246 = vector.broadcast %cst_63 : f32 to vector<2x32xf32>
    %247 = arith.subf %246, %240 : vector<2x32xf32>
    %248 = arith.mulf %247, %245 : vector<2x32xf32>
    %249 = arith.mulf %240, %199 : vector<2x32xf32>
    %250 = arith.addf %248, %249 : vector<2x32xf32>
    %251 = vector.extract_strided_slice %17 {offsets = [10, 0], sizes = [2, 96], strides = [1, 1]} : vector<16x96xf32> to vector<2x96xf32>
    %cst_64 = arith.constant dense<0.000000e+00> : vector<2x96xf32>
    %252 = tpu.matmul %224, %1, %cst_64 {dimension_numbers = #tpu.dot_dimension_numbers<[1], [0], [0], [1], [0, 0, 1, 1], [], []>} : vector<2x32xf32>, vector<32x96xf32>, vector<2x96xf32> -> vector<2x96xf32>
    %253 = arith.addf %252, %4 : vector<2x96xf32>
    %254 = vector.extract_strided_slice %251 {offsets = [0, 0], sizes = [2, 64], strides = [1, 1]} : vector<2x96xf32> to vector<2x64xf32>
    %255 = vector.extract_strided_slice %253 {offsets = [0, 0], sizes = [2, 64], strides = [1, 1]} : vector<2x96xf32> to vector<2x64xf32>
    %256 = arith.addf %254, %255 : vector<2x64xf32>
    %cst_65 = arith.constant 5.000000e-01 : f32
    %257 = vector.broadcast %cst_65 : f32 to vector<2x64xf32>
    %258 = arith.mulf %257, %256 : vector<2x64xf32>
    %259 = math.tanh %258 : vector<2x64xf32>
    %cst_66 = arith.constant 5.000000e-01 : f32
    %260 = vector.broadcast %cst_66 : f32 to vector<2x64xf32>
    %261 = arith.mulf %260, %259 : vector<2x64xf32>
    %cst_67 = arith.constant 5.000000e-01 : f32
    %262 = vector.broadcast %cst_67 : f32 to vector<2x64xf32>
    %263 = arith.addf %261, %262 : vector<2x64xf32>
    %264 = vector.extract_strided_slice %263 {offsets = [0, 0], sizes = [2, 32], strides = [1, 1]} : vector<2x64xf32> to vector<2x32xf32>
    %265 = vector.extract_strided_slice %263 {offsets = [0, 32], sizes = [2, 32], strides = [1, 1]} : vector<2x64xf32> to vector<2x32xf32>
    %266 = vector.extract_strided_slice %251 {offsets = [0, 64], sizes = [2, 32], strides = [1, 1]} : vector<2x96xf32> to vector<2x32xf32>
    %267 = vector.extract_strided_slice %253 {offsets = [0, 64], sizes = [2, 32], strides = [1, 1]} : vector<2x96xf32> to vector<2x32xf32>
    %268 = arith.mulf %264, %267 : vector<2x32xf32>
    %269 = arith.addf %266, %268 : vector<2x32xf32>
    %270 = math.tanh %269 : vector<2x32xf32>
    %cst_68 = arith.constant 1.000000e+00 : f32
    %271 = vector.broadcast %cst_68 : f32 to vector<2x32xf32>
    %272 = arith.subf %271, %265 : vector<2x32xf32>
    %273 = arith.mulf %272, %270 : vector<2x32xf32>
    %274 = arith.mulf %265, %224 : vector<2x32xf32>
    %275 = arith.addf %273, %274 : vector<2x32xf32>
    %cst_69 = arith.constant dense<0.000000e+00> : vector<2x96xf32>
    %276 = tpu.matmul %224, %5, %cst_69 {dimension_numbers = #tpu.dot_dimension_numbers<[1], [0], [0], [1], [0, 0, 1, 1], [], []>} : vector<2x32xf32>, vector<32x96xf32>, vector<2x96xf32> -> vector<2x96xf32>
    %277 = arith.addf %276, %9 : vector<2x96xf32>
    %cst_70 = arith.constant dense<0.000000e+00> : vector<2x96xf32>
    %278 = tpu.matmul %250, %6, %cst_70 {dimension_numbers = #tpu.dot_dimension_numbers<[1], [0], [0], [1], [0, 0, 1, 1], [], []>} : vector<2x32xf32>, vector<32x96xf32>, vector<2x96xf32> -> vector<2x96xf32>
    %279 = arith.addf %278, %12 : vector<2x96xf32>
    %280 = vector.extract_strided_slice %277 {offsets = [0, 0], sizes = [2, 64], strides = [1, 1]} : vector<2x96xf32> to vector<2x64xf32>
    %281 = vector.extract_strided_slice %279 {offsets = [0, 0], sizes = [2, 64], strides = [1, 1]} : vector<2x96xf32> to vector<2x64xf32>
    %282 = arith.addf %280, %281 : vector<2x64xf32>
    %cst_71 = arith.constant 5.000000e-01 : f32
    %283 = vector.broadcast %cst_71 : f32 to vector<2x64xf32>
    %284 = arith.mulf %283, %282 : vector<2x64xf32>
    %285 = math.tanh %284 : vector<2x64xf32>
    %cst_72 = arith.constant 5.000000e-01 : f32
    %286 = vector.broadcast %cst_72 : f32 to vector<2x64xf32>
    %287 = arith.mulf %286, %285 : vector<2x64xf32>
    %cst_73 = arith.constant 5.000000e-01 : f32
    %288 = vector.broadcast %cst_73 : f32 to vector<2x64xf32>
    %289 = arith.addf %287, %288 : vector<2x64xf32>
    %290 = vector.extract_strided_slice %289 {offsets = [0, 0], sizes = [2, 32], strides = [1, 1]} : vector<2x64xf32> to vector<2x32xf32>
    %291 = vector.extract_strided_slice %289 {offsets = [0, 32], sizes = [2, 32], strides = [1, 1]} : vector<2x64xf32> to vector<2x32xf32>
    %292 = vector.extract_strided_slice %277 {offsets = [0, 64], sizes = [2, 32], strides = [1, 1]} : vector<2x96xf32> to vector<2x32xf32>
    %293 = vector.extract_strided_slice %279 {offsets = [0, 64], sizes = [2, 32], strides = [1, 1]} : vector<2x96xf32> to vector<2x32xf32>
    %294 = arith.mulf %290, %293 : vector<2x32xf32>
    %295 = arith.addf %292, %294 : vector<2x32xf32>
    %296 = math.tanh %295 : vector<2x32xf32>
    %cst_74 = arith.constant 1.000000e+00 : f32
    %297 = vector.broadcast %cst_74 : f32 to vector<2x32xf32>
    %298 = arith.subf %297, %291 : vector<2x32xf32>
    %299 = arith.mulf %298, %296 : vector<2x32xf32>
    %300 = arith.mulf %291, %250 : vector<2x32xf32>
    %301 = arith.addf %299, %300 : vector<2x32xf32>
    %302 = vector.extract_strided_slice %17 {offsets = [12, 0], sizes = [2, 96], strides = [1, 1]} : vector<16x96xf32> to vector<2x96xf32>
    %cst_75 = arith.constant dense<0.000000e+00> : vector<2x96xf32>
    %303 = tpu.matmul %275, %1, %cst_75 {dimension_numbers = #tpu.dot_dimension_numbers<[1], [0], [0], [1], [0, 0, 1, 1], [], []>} : vector<2x32xf32>, vector<32x96xf32>, vector<2x96xf32> -> vector<2x96xf32>
    %304 = arith.addf %303, %4 : vector<2x96xf32>
    %305 = vector.extract_strided_slice %302 {offsets = [0, 0], sizes = [2, 64], strides = [1, 1]} : vector<2x96xf32> to vector<2x64xf32>
    %306 = vector.extract_strided_slice %304 {offsets = [0, 0], sizes = [2, 64], strides = [1, 1]} : vector<2x96xf32> to vector<2x64xf32>
    %307 = arith.addf %305, %306 : vector<2x64xf32>
    %cst_76 = arith.constant 5.000000e-01 : f32
    %308 = vector.broadcast %cst_76 : f32 to vector<2x64xf32>
    %309 = arith.mulf %308, %307 : vector<2x64xf32>
    %310 = math.tanh %309 : vector<2x64xf32>
    %cst_77 = arith.constant 5.000000e-01 : f32
    %311 = vector.broadcast %cst_77 : f32 to vector<2x64xf32>
    %312 = arith.mulf %311, %310 : vector<2x64xf32>
    %cst_78 = arith.constant 5.000000e-01 : f32
    %313 = vector.broadcast %cst_78 : f32 to vector<2x64xf32>
    %314 = arith.addf %312, %313 : vector<2x64xf32>
    %315 = vector.extract_strided_slice %314 {offsets = [0, 0], sizes = [2, 32], strides = [1, 1]} : vector<2x64xf32> to vector<2x32xf32>
    %316 = vector.extract_strided_slice %314 {offsets = [0, 32], sizes = [2, 32], strides = [1, 1]} : vector<2x64xf32> to vector<2x32xf32>
    %317 = vector.extract_strided_slice %302 {offsets = [0, 64], sizes = [2, 32], strides = [1, 1]} : vector<2x96xf32> to vector<2x32xf32>
    %318 = vector.extract_strided_slice %304 {offsets = [0, 64], sizes = [2, 32], strides = [1, 1]} : vector<2x96xf32> to vector<2x32xf32>
    %319 = arith.mulf %315, %318 : vector<2x32xf32>
    %320 = arith.addf %317, %319 : vector<2x32xf32>
    %321 = math.tanh %320 : vector<2x32xf32>
    %cst_79 = arith.constant 1.000000e+00 : f32
    %322 = vector.broadcast %cst_79 : f32 to vector<2x32xf32>
    %323 = arith.subf %322, %316 : vector<2x32xf32>
    %324 = arith.mulf %323, %321 : vector<2x32xf32>
    %325 = arith.mulf %316, %275 : vector<2x32xf32>
    %326 = arith.addf %324, %325 : vector<2x32xf32>
    %cst_80 = arith.constant dense<0.000000e+00> : vector<2x96xf32>
    %327 = tpu.matmul %275, %5, %cst_80 {dimension_numbers = #tpu.dot_dimension_numbers<[1], [0], [0], [1], [0, 0, 1, 1], [], []>} : vector<2x32xf32>, vector<32x96xf32>, vector<2x96xf32> -> vector<2x96xf32>
    %328 = arith.addf %327, %9 : vector<2x96xf32>
    %cst_81 = arith.constant dense<0.000000e+00> : vector<2x96xf32>
    %329 = tpu.matmul %301, %6, %cst_81 {dimension_numbers = #tpu.dot_dimension_numbers<[1], [0], [0], [1], [0, 0, 1, 1], [], []>} : vector<2x32xf32>, vector<32x96xf32>, vector<2x96xf32> -> vector<2x96xf32>
    %330 = arith.addf %329, %12 : vector<2x96xf32>
    %331 = vector.extract_strided_slice %328 {offsets = [0, 0], sizes = [2, 64], strides = [1, 1]} : vector<2x96xf32> to vector<2x64xf32>
    %332 = vector.extract_strided_slice %330 {offsets = [0, 0], sizes = [2, 64], strides = [1, 1]} : vector<2x96xf32> to vector<2x64xf32>
    %333 = arith.addf %331, %332 : vector<2x64xf32>
    %cst_82 = arith.constant 5.000000e-01 : f32
    %334 = vector.broadcast %cst_82 : f32 to vector<2x64xf32>
    %335 = arith.mulf %334, %333 : vector<2x64xf32>
    %336 = math.tanh %335 : vector<2x64xf32>
    %cst_83 = arith.constant 5.000000e-01 : f32
    %337 = vector.broadcast %cst_83 : f32 to vector<2x64xf32>
    %338 = arith.mulf %337, %336 : vector<2x64xf32>
    %cst_84 = arith.constant 5.000000e-01 : f32
    %339 = vector.broadcast %cst_84 : f32 to vector<2x64xf32>
    %340 = arith.addf %338, %339 : vector<2x64xf32>
    %341 = vector.extract_strided_slice %340 {offsets = [0, 0], sizes = [2, 32], strides = [1, 1]} : vector<2x64xf32> to vector<2x32xf32>
    %342 = vector.extract_strided_slice %340 {offsets = [0, 32], sizes = [2, 32], strides = [1, 1]} : vector<2x64xf32> to vector<2x32xf32>
    %343 = vector.extract_strided_slice %328 {offsets = [0, 64], sizes = [2, 32], strides = [1, 1]} : vector<2x96xf32> to vector<2x32xf32>
    %344 = vector.extract_strided_slice %330 {offsets = [0, 64], sizes = [2, 32], strides = [1, 1]} : vector<2x96xf32> to vector<2x32xf32>
    %345 = arith.mulf %341, %344 : vector<2x32xf32>
    %346 = arith.addf %343, %345 : vector<2x32xf32>
    %347 = math.tanh %346 : vector<2x32xf32>
    %cst_85 = arith.constant 1.000000e+00 : f32
    %348 = vector.broadcast %cst_85 : f32 to vector<2x32xf32>
    %349 = arith.subf %348, %342 : vector<2x32xf32>
    %350 = arith.mulf %349, %347 : vector<2x32xf32>
    %351 = arith.mulf %342, %301 : vector<2x32xf32>
    %352 = arith.addf %350, %351 : vector<2x32xf32>
    %353 = vector.extract_strided_slice %17 {offsets = [14, 0], sizes = [2, 96], strides = [1, 1]} : vector<16x96xf32> to vector<2x96xf32>
    %cst_86 = arith.constant dense<0.000000e+00> : vector<2x96xf32>
    %354 = tpu.matmul %326, %1, %cst_86 {dimension_numbers = #tpu.dot_dimension_numbers<[1], [0], [0], [1], [0, 0, 1, 1], [], []>} : vector<2x32xf32>, vector<32x96xf32>, vector<2x96xf32> -> vector<2x96xf32>
    %355 = arith.addf %354, %4 : vector<2x96xf32>
    %356 = vector.extract_strided_slice %353 {offsets = [0, 0], sizes = [2, 64], strides = [1, 1]} : vector<2x96xf32> to vector<2x64xf32>
    %357 = vector.extract_strided_slice %355 {offsets = [0, 0], sizes = [2, 64], strides = [1, 1]} : vector<2x96xf32> to vector<2x64xf32>
    %358 = arith.addf %356, %357 : vector<2x64xf32>
    %cst_87 = arith.constant 5.000000e-01 : f32
    %359 = vector.broadcast %cst_87 : f32 to vector<2x64xf32>
    %360 = arith.mulf %359, %358 : vector<2x64xf32>
    %361 = math.tanh %360 : vector<2x64xf32>
    %cst_88 = arith.constant 5.000000e-01 : f32
    %362 = vector.broadcast %cst_88 : f32 to vector<2x64xf32>
    %363 = arith.mulf %362, %361 : vector<2x64xf32>
    %cst_89 = arith.constant 5.000000e-01 : f32
    %364 = vector.broadcast %cst_89 : f32 to vector<2x64xf32>
    %365 = arith.addf %363, %364 : vector<2x64xf32>
    %366 = vector.extract_strided_slice %365 {offsets = [0, 0], sizes = [2, 32], strides = [1, 1]} : vector<2x64xf32> to vector<2x32xf32>
    %367 = vector.extract_strided_slice %365 {offsets = [0, 32], sizes = [2, 32], strides = [1, 1]} : vector<2x64xf32> to vector<2x32xf32>
    %368 = vector.extract_strided_slice %353 {offsets = [0, 64], sizes = [2, 32], strides = [1, 1]} : vector<2x96xf32> to vector<2x32xf32>
    %369 = vector.extract_strided_slice %355 {offsets = [0, 64], sizes = [2, 32], strides = [1, 1]} : vector<2x96xf32> to vector<2x32xf32>
    %370 = arith.mulf %366, %369 : vector<2x32xf32>
    %371 = arith.addf %368, %370 : vector<2x32xf32>
    %372 = math.tanh %371 : vector<2x32xf32>
    %cst_90 = arith.constant 1.000000e+00 : f32
    %373 = vector.broadcast %cst_90 : f32 to vector<2x32xf32>
    %374 = arith.subf %373, %367 : vector<2x32xf32>
    %375 = arith.mulf %374, %372 : vector<2x32xf32>
    %376 = arith.mulf %367, %326 : vector<2x32xf32>
    %377 = arith.addf %375, %376 : vector<2x32xf32>
    %cst_91 = arith.constant dense<0.000000e+00> : vector<2x96xf32>
    %378 = tpu.matmul %326, %5, %cst_91 {dimension_numbers = #tpu.dot_dimension_numbers<[1], [0], [0], [1], [0, 0, 1, 1], [], []>} : vector<2x32xf32>, vector<32x96xf32>, vector<2x96xf32> -> vector<2x96xf32>
    %379 = arith.addf %378, %9 : vector<2x96xf32>
    %cst_92 = arith.constant dense<0.000000e+00> : vector<2x96xf32>
    %380 = tpu.matmul %352, %6, %cst_92 {dimension_numbers = #tpu.dot_dimension_numbers<[1], [0], [0], [1], [0, 0, 1, 1], [], []>} : vector<2x32xf32>, vector<32x96xf32>, vector<2x96xf32> -> vector<2x96xf32>
    %381 = arith.addf %380, %12 : vector<2x96xf32>
    %382 = vector.extract_strided_slice %379 {offsets = [0, 0], sizes = [2, 64], strides = [1, 1]} : vector<2x96xf32> to vector<2x64xf32>
    %383 = vector.extract_strided_slice %381 {offsets = [0, 0], sizes = [2, 64], strides = [1, 1]} : vector<2x96xf32> to vector<2x64xf32>
    %384 = arith.addf %382, %383 : vector<2x64xf32>
    %cst_93 = arith.constant 5.000000e-01 : f32
    %385 = vector.broadcast %cst_93 : f32 to vector<2x64xf32>
    %386 = arith.mulf %385, %384 : vector<2x64xf32>
    %387 = math.tanh %386 : vector<2x64xf32>
    %cst_94 = arith.constant 5.000000e-01 : f32
    %388 = vector.broadcast %cst_94 : f32 to vector<2x64xf32>
    %389 = arith.mulf %388, %387 : vector<2x64xf32>
    %cst_95 = arith.constant 5.000000e-01 : f32
    %390 = vector.broadcast %cst_95 : f32 to vector<2x64xf32>
    %391 = arith.addf %389, %390 : vector<2x64xf32>
    %392 = vector.extract_strided_slice %391 {offsets = [0, 0], sizes = [2, 32], strides = [1, 1]} : vector<2x64xf32> to vector<2x32xf32>
    %393 = vector.extract_strided_slice %391 {offsets = [0, 32], sizes = [2, 32], strides = [1, 1]} : vector<2x64xf32> to vector<2x32xf32>
    %394 = vector.extract_strided_slice %379 {offsets = [0, 64], sizes = [2, 32], strides = [1, 1]} : vector<2x96xf32> to vector<2x32xf32>
    %395 = vector.extract_strided_slice %381 {offsets = [0, 64], sizes = [2, 32], strides = [1, 1]} : vector<2x96xf32> to vector<2x32xf32>
    %396 = arith.mulf %392, %395 : vector<2x32xf32>
    %397 = arith.addf %394, %396 : vector<2x32xf32>
    %398 = math.tanh %397 : vector<2x32xf32>
    %cst_96 = arith.constant 1.000000e+00 : f32
    %399 = vector.broadcast %cst_96 : f32 to vector<2x32xf32>
    %400 = arith.subf %399, %393 : vector<2x32xf32>
    %401 = arith.mulf %400, %398 : vector<2x32xf32>
    %402 = arith.mulf %393, %352 : vector<2x32xf32>
    %403 = arith.addf %401, %402 : vector<2x32xf32>
    %cst_97 = arith.constant dense<0.000000e+00> : vector<2x96xf32>
    %404 = tpu.matmul %377, %5, %cst_97 {dimension_numbers = #tpu.dot_dimension_numbers<[1], [0], [0], [1], [0, 0, 1, 1], [], []>} : vector<2x32xf32>, vector<32x96xf32>, vector<2x96xf32> -> vector<2x96xf32>
    %405 = arith.addf %404, %9 : vector<2x96xf32>
    %cst_98 = arith.constant dense<0.000000e+00> : vector<2x96xf32>
    %406 = tpu.matmul %403, %6, %cst_98 {dimension_numbers = #tpu.dot_dimension_numbers<[1], [0], [0], [1], [0, 0, 1, 1], [], []>} : vector<2x32xf32>, vector<32x96xf32>, vector<2x96xf32> -> vector<2x96xf32>
    %407 = arith.addf %406, %12 : vector<2x96xf32>
    %408 = vector.extract_strided_slice %405 {offsets = [0, 0], sizes = [2, 64], strides = [1, 1]} : vector<2x96xf32> to vector<2x64xf32>
    %409 = vector.extract_strided_slice %407 {offsets = [0, 0], sizes = [2, 64], strides = [1, 1]} : vector<2x96xf32> to vector<2x64xf32>
    %410 = arith.addf %408, %409 : vector<2x64xf32>
    %cst_99 = arith.constant 5.000000e-01 : f32
    %411 = vector.broadcast %cst_99 : f32 to vector<2x64xf32>
    %412 = arith.mulf %411, %410 : vector<2x64xf32>
    %413 = math.tanh %412 : vector<2x64xf32>
    %cst_100 = arith.constant 5.000000e-01 : f32
    %414 = vector.broadcast %cst_100 : f32 to vector<2x64xf32>
    %415 = arith.mulf %414, %413 : vector<2x64xf32>
    %cst_101 = arith.constant 5.000000e-01 : f32
    %416 = vector.broadcast %cst_101 : f32 to vector<2x64xf32>
    %417 = arith.addf %415, %416 : vector<2x64xf32>
    %418 = vector.extract_strided_slice %417 {offsets = [0, 0], sizes = [2, 32], strides = [1, 1]} : vector<2x64xf32> to vector<2x32xf32>
    %419 = vector.extract_strided_slice %417 {offsets = [0, 32], sizes = [2, 32], strides = [1, 1]} : vector<2x64xf32> to vector<2x32xf32>
    %420 = vector.extract_strided_slice %405 {offsets = [0, 64], sizes = [2, 32], strides = [1, 1]} : vector<2x96xf32> to vector<2x32xf32>
    %421 = vector.extract_strided_slice %407 {offsets = [0, 64], sizes = [2, 32], strides = [1, 1]} : vector<2x96xf32> to vector<2x32xf32>
    %422 = arith.mulf %418, %421 : vector<2x32xf32>
    %423 = arith.addf %420, %422 : vector<2x32xf32>
    %424 = math.tanh %423 : vector<2x32xf32>
    %cst_102 = arith.constant 1.000000e+00 : f32
    %425 = vector.broadcast %cst_102 : f32 to vector<2x32xf32>
    %426 = arith.subf %425, %419 : vector<2x32xf32>
    %427 = arith.mulf %426, %424 : vector<2x32xf32>
    %428 = arith.mulf %419, %403 : vector<2x32xf32>
    %429 = arith.addf %427, %428 : vector<2x32xf32>
    %c0_103 = arith.constant 0 : index
    %c0_104 = arith.constant 0 : index
    %c0_105 = arith.constant 0 : index
    %430 = vector.load %arg3[%c0_103, %c0_104, %c0_105] : memref<2x2x32xf32, #tpu.memory_space<vmem>>, vector<1x2x32xf32>
    %431 = vector.shape_cast %430 : vector<1x2x32xf32> to vector<2x32xf32>
    %432 = vector.shape_cast %377 : vector<2x32xf32> to vector<1x2x32xf32>
    tpu.vector_store %arg3[%c0_103, %c0_104, %c0_105], %432 {strides = array<i32>} : memref<2x2x32xf32, #tpu.memory_space<vmem>>, vector<1x2x32xf32>,
    %c1_106 = arith.constant 1 : index
    %c0_107 = arith.constant 0 : index
    %c0_108 = arith.constant 0 : index
    %433 = vector.load %arg3[%c1_106, %c0_107, %c0_108] : memref<2x2x32xf32, #tpu.memory_space<vmem>>, vector<1x2x32xf32>
    %434 = vector.shape_cast %433 : vector<1x2x32xf32> to vector<2x32xf32>
    %435 = vector.shape_cast %429 : vector<2x32xf32> to vector<1x2x32xf32>
    tpu.vector_store %arg3[%c1_106, %c0_107, %c0_108], %435 {strides = array<i32>} : memref<2x2x32xf32, #tpu.memory_space<vmem>>, vector<1x2x32xf32>,
    return
  }
}

</mosaic_0001>

<llo_original>
// kernel: tpu_custom_call.1
$region0: #{tpu_custom_call.1}
  #allocation0 [shape = 'u32[]', space=smem, size = 0x4, offset = 0x4, fixed_abs, tag = 'smem constant byte address 0x4 - core index']
  #allocation1 [shape = 'u32[144,128]{1,0:T(1,128)}', space=vmem, size = 0x12000, scoped, tag = 'internal scratch']
  %s0 = inlined_call_operand.vmem [shape: f32[16,4], index: 0, kind: input, shape index: {}]
  %s1 = inlined_call_operand.vmem [shape: f32[2,2,32], index: 1, kind: input, shape index: {}]
  %s2 = inlined_call_operand.vmem [shape: f32[120,96], index: 2, kind: input, shape index: {}]
  %s3 = inlined_call_operand.hbm [shape: f32[2,2,32], index: 3, kind: output, shape index: {}]
  %s4 = sld [smem:[#allocation0]]
  $region22: #{tpu_custom_call.1} parent=0
    _
  %s6 = ssub.s32 1, %s4
  %s7 = scalar_select 0, %s6, %s4
  $region1: #{tpu_custom_call.1} parent=0
    #allocation2 [shape = 'u8[2048]{0}', space=vmem, size = 0x800, scoped, tag = 'output window, operand 0, single buffered']
    #allocation3 [shape = 's32[1]{0}', space=sflag, size = 0x4, scoped, tag = 'scoped memory for tpu_custom_call.1']
    %8 = vsyncpa [#allocation3], 0
    // Predicated region
    $region2: #{tpu_custom_call.1} parent=1 // pred_check
      _
    $region3: #{tpu_custom_call.1} parent=1 // pred_check_branch
      %10 = sbr.rel (0) target = $region5
    $region4: #{tpu_custom_call.1} parent=1 // pred_region
      _
    $region5: #{tpu_custom_call.1} parent=1 // pred_fallthru
      _
    // Predicated region
    $region6: #{tpu_custom_call.1} parent=1 // pred_check
      _
    $region7: #{tpu_custom_call.1} parent=1 // pred_check_branch
      %12 = sbr.rel (0) target = $region9
    $region8: #{tpu_custom_call.1} parent=1 // pred_region
      _
    $region9: #{tpu_custom_call.1} parent=1 // pred_fallthru
      _
    // Predicated region
    $region10: #{tpu_custom_call.1} parent=1 // pred_check
      _
    $region11: #{tpu_custom_call.1} parent=1 // pred_check_branch
      %14 = sbr.rel (0) target = $region13
    $region12: #{tpu_custom_call.1} parent=1 // pred_region
      _
    $region13: #{tpu_custom_call.1} parent=1 // pred_fallthru
      _
    %v15 = vld [vmem:[%s2] sm:$0xf]
    %v16 = vld [vmem:[%s2 + $0x8] sm:$0xff]
    %v17 = vld [vmem:[%s2 + $0x10] sm:$0xff]
    %v18 = vld [vmem:[%s2 + $0x18] sm:$0xff]
    %v19 = vld [vmem:[%s2 + $0x20] sm:$0xff]
    %v20 = vld [vmem:[%s2 + $0x29] sm:$0x1]
    %v21 = vlaneseq
    %v22 = vshrl.u32 %v21, 7
    %v23 = vsub.s32 0, %v22
    %v24 = vrot.slane %v20, %v23
    %v25 = vld [vmem:[%s2 + $0x30] sm:$0xff]
    %v26 = vld [vmem:[%s2 + $0x38] sm:$0xff]
    %v27 = vld [vmem:[%s2 + $0x40] sm:$0xff]
    %v28 = vld [vmem:[%s2 + $0x48] sm:$0xff]
    %v29 = vld [vmem:[%s2 + $0x50] sm:$0xff]
    %v30 = vld [vmem:[%s2 + $0x58] sm:$0xff]
    %v31 = vld [vmem:[%s2 + $0x60] sm:$0xff]
    %v32 = vld [vmem:[%s2 + $0x68] sm:$0xff]
    %v33 = vld [vmem:[%s2 + $0x70] sm:$0x1]
    %v34 = vlaneseq
    %v35 = vshrl.u32 %v34, 7
    %v36 = vsub.s32 0, %v35
    %v37 = vrot.slane %v33, %v36
    %v38 = vld [vmem:[%s2 + $0x71] sm:$0x1]
    %v39 = vlaneseq
    %v40 = vshrl.u32 %v39, 7
    %v41 = vsub.s32 0, %v40
    %v42 = vrot.slane %v38, %v41
    %v43 = vld [vmem:[%s0] sm:$0xff]
    %v44 = vld [vmem:[%s0 + $0x8] sm:$0xff]
    %v45 = vld [vmem:[%s2 + $0x28] sm:$0x1]
    %v46 = vlaneseq
    %v47 = vshrl.u32 %v46, 7
    %v48 = vsub.s32 0, %v47
    %v49 = vrot.slane %v45, %v48
    %vm50 = vcmask 31744
    %v52 = vsel %vm50, %v43, 0
    %v55 = vsel %vm50, %v44, 0
    %vm57 = vcmask 1043456
    %v59 = vsel %vm57, %v15, 0
    %61 = vmatprep.subr.mxu0 0.0
    %62 = vmatpush1.msra.mxu0 %v59
    %63 = vmatprep.subr.mxu0 0.0
    %64 = vmatpush1.msra.mxu0 0.0
    %65 = vmatprep.subr.mxu0 0.0
    %66 = vmatpush1.msra.mxu0 0.0
    %67 = vmatprep.subr.mxu0 0.0
    %68 = vmatpush1.msra.mxu0 0.0
    %69 = vmatprep.subr.mxu0 0.0
    %70 = vmatpush1.msra.mxu0 0.0
    %71 = vmatprep.subr.mxu0 0.0
    %72 = vmatpush1.msra.mxu0 0.0
    %73 = vmatprep.subr.mxu0 0.0
    %74 = vmatpush1.msra.mxu0 0.0
    %75 = vmatprep.subr.mxu0 0.0
    %76 = vmatpush1.msra.mxu0 0.0
    %77 = vmatprep.subr.mxu0 0.0
    %78 = vmatpush1.msra.mxu0 0.0
    %79 = vmatprep.subr.mxu0 0.0
    %80 = vmatpush1.msra.mxu0 0.0
    %81 = vmatprep.subr.mxu0 0.0
    %82 = vmatpush1.msra.mxu0 0.0
    %83 = vmatprep.subr.mxu0 0.0
    %84 = vmatpush1.msra.mxu0 0.0
    %85 = vmatprep.subr.mxu0 0.0
    %86 = vmatpush1.msra.mxu0 0.0
    %87 = vmatprep.subr.mxu0 0.0
    %88 = vmatpush1.msra.mxu0 0.0
    %89 = vmatprep.subr.mxu0 0.0
    %90 = vmatpush1.msra.mxu0 0.0
    %91 = vmatprep.subr.mxu0 0.0
    %92 = vmatpush1.msra.mxu0 0.0
    %93 = vmatprep.subr.mxu0 0.0
    %94 = vmatpush1.msra.mxu0 0.0
    %95 = vmatprep.subr.mxu0 0.0
    %96 = vmatpush1.msra.mxu0 0.0
    %97 = vmatprep.subr.mxu0 0.0
    %98 = vmatpush1.msra.mxu0 0.0
    %99 = vmatprep.subr.mxu0 0.0
    %100 = vmatpush1.msra.mxu0 0.0
    %101 = vmatprep.subr.mxu0 0.0
    %102 = vmatpush1.msra.mxu0 0.0
    %103 = vmatprep.subr.mxu0 0.0
    %104 = vmatpush1.msra.mxu0 0.0
    %105 = vmatprep.subr.mxu0 0.0
    %106 = vmatpush1.msra.mxu0 0.0
    %107 = vmatprep.subr.mxu0 0.0
    %108 = vmatpush1.msra.mxu0 0.0
    %109 = vmatprep.subr.mxu0 0.0
    %110 = vmatpush1.msra.mxu0 0.0
    %111 = vmatprep.subr.mxu0 0.0
    %112 = vmatpush1.msra.mxu0 0.0
    %113 = vmatprep.subr.mxu0 0.0
    %114 = vmatpush1.msra.mxu0 0.0
    %115 = vmatprep.subr.mxu0 0.0
    %116 = vmatpush1.msra.mxu0 0.0
    %117 = vmatprep.subr.mxu0 0.0
    %118 = vmatpush1.msra.mxu0 0.0
    %119 = vmatprep.subr.mxu0 0.0
    %120 = vmatpush1.msra.mxu0 0.0
    %121 = vmatprep.subr.mxu0 0.0
    %122 = vmatpush1.msra.mxu0 0.0
    %123 = vmatprep.subr.mxu0 0.0
    %124 = vmatpush1.msra.mxu0 0.0
    %125 = vmatprep.mubr.f32.mxu0 0.0
    %126 = vmatmul.mubr.f32.gmra.mrb[0].mxu0 %v52
    %v127 = vpop.f32.mrb[0].mxu0
    %v128 = vadd.f32 %v49, %v127
    %v129 = vpop.f32.mrb[0].mxu0
    %130 = vmatprep.mubr.f32.mxu0 0.0
    %131 = vmatmul.mubr.f32.gmra.mrb[0].mxu0 %v55
    %v132 = vpop.f32.mrb[0].mxu0
    %v133 = vadd.f32 %v49, %v132
    %v134 = vpop.f32.mrb[0].mxu0
    %135 = vdwg.mxu0
    %v136 = vld [vmem:[%s1] sm:$0x3]
    %s137 = scalar_lea.vmem %s1, 2
    %v138 = vld [vmem:[%s137] sm:$0x3]
    %vm139 = vcmask 261120
    %v141 = vsel %vm139, %v136, 0
    %143 = vmatprep.subr.mxu0 0.0
    %144 = vmatpush1.msra.mxu0 %v16
    %145 = vmatprep.subr.mxu0 0.0
    %146 = vmatpush1.msra.mxu0 %v17
    %147 = vmatprep.subr.mxu0 0.0
    %148 = vmatpush1.msra.mxu0 %v18
    %149 = vmatprep.subr.mxu0 0.0
    %150 = vmatpush1.msra.mxu0 %v19
    %151 = vmatprep.subr.mxu0 0.0
    %152 = vmatpush1.msra.mxu0 0.0
    %153 = vmatprep.subr.mxu0 0.0
    %154 = vmatpush1.msra.mxu0 0.0
    %155 = vmatprep.subr.mxu0 0.0
    %156 = vmatpush1.msra.mxu0 0.0
    %157 = vmatprep.subr.mxu0 0.0
    %158 = vmatpush1.msra.mxu0 0.0
    %159 = vmatprep.subr.mxu0 0.0
    %160 = vmatpush1.msra.mxu0 0.0
    %161 = vmatprep.subr.mxu0 0.0
    %162 = vmatpush1.msra.mxu0 0.0
    %163 = vmatprep.subr.mxu0 0.0
    %164 = vmatpush1.msra.mxu0 0.0
    %165 = vmatprep.subr.mxu0 0.0
    %166 = vmatpush1.msra.mxu0 0.0
    %167 = vmatprep.subr.mxu0 0.0
    %168 = vmatpush1.msra.mxu0 0.0
    %169 = vmatprep.subr.mxu0 0.0
    %170 = vmatpush1.msra.mxu0 0.0
    %171 = vmatprep.subr.mxu0 0.0
    %172 = vmatpush1.msra.mxu0 0.0
    %173 = vmatprep.subr.mxu0 0.0
    %174 = vmatpush1.msra.mxu0 0.0
    %175 = vmatprep.subr.mxu0 0.0
    %176 = vmatpush1.msra.mxu0 0.0
    %177 = vmatprep.subr.mxu0 0.0
    %178 = vmatpush1.msra.mxu0 0.0
    %179 = vmatprep.subr.mxu0 0.0
    %180 = vmatpush1.msra.mxu0 0.0
    %181 = vmatprep.subr.mxu0 0.0
    %182 = vmatpush1.msra.mxu0 0.0
    %183 = vmatprep.subr.mxu0 0.0
    %184 = vmatpush1.msra.mxu0 0.0
    %185 = vmatprep.subr.mxu0 0.0
    %186 = vmatpush1.msra.mxu0 0.0
    %187 = vmatprep.subr.mxu0 0.0
    %188 = vmatpush1.msra.mxu0 0.0
    %189 = vmatprep.subr.mxu0 0.0
    %190 = vmatpush1.msra.mxu0 0.0
    %191 = vmatprep.subr.mxu0 0.0
    %192 = vmatpush1.msra.mxu0 0.0
    %193 = vmatprep.subr.mxu0 0.0
    %194 = vmatpush1.msra.mxu0 0.0
    %195 = vmatprep.subr.mxu0 0.0
    %196 = vmatpush1.msra.mxu0 0.0
    %197 = vmatprep.subr.mxu0 0.0
    %198 = vmatpush1.msra.mxu0 0.0
    %199 = vmatprep.subr.mxu0 0.0
    %200 = vmatpush1.msra.mxu0 0.0
    %201 = vmatprep.subr.mxu0 0.0
    %202 = vmatpush1.msra.mxu0 0.0
    %203 = vmatprep.subr.mxu0 0.0
    %204 = vmatpush1.msra.mxu0 0.0
    %205 = vmatprep.subr.mxu0 0.0
    %206 = vmatpush1.msra.mxu0 0.0
    %207 = vmatprep.mubr.f32.mxu0 0.0
    %208 = vmatmul.mubr.f32.gmra.mrb[0].mxu0 %v141
    %v209 = vpop.f32.mrb[0].mxu0
    %v210 = vadd.f32 %v24, %v209
    %v211 = vpop.f32.mrb[0].mxu0
    %212 = vdwg.mxu0
    %v213 = vadd.f32 %v128, %v210
    %v214 = vmul.f32 %v213, 0.5
    %v215 = vtanh.pop %v214
    %v216 = vmul.f32 %v215, 0.5
    %v217 = vadd.f32 %v216, 0.5
    %219 = vrot.lane.b32.xlu0 %v210, 64
    %v220 = vpop.permute.xlu0 %219
    %v222 = vmul.f32 %v217, %v220
    %224 = vrot.lane.b32.xlu0 %v222, 64
    %v225 = vpop.permute.xlu0 %224
    %v227 = vadd.f32 %v128, %v225
    %v228 = vtanh.pop %v227
    %v229 = vsub.f32 1.0, %v217
    %231 = vrot.lane.b32.xlu0 %v228, 96
    %v232 = vpop.permute.xlu0 %231
    %v234 = vmul.f32 %v229, %v232
    %235 = vrot.lane.b32.xlu0 %v136, 32
    %v236 = vpop.permute.xlu0 %235
    %v238 = vmul.f32 %v217, %v236
    %v239 = vadd.f32 %v234, %v238
    %241 = vrot.lane.b32.xlu0 %v239, 96
    %v242 = vpop.permute.xlu0 %241
    %v243 = vsel %vm139, %v242, 0
    %245 = vmatprep.subr.mxu0 0.0
    %246 = vmatpush1.msra.mxu0 %v16
    %247 = vmatprep.subr.mxu0 0.0
    %248 = vmatpush1.msra.mxu0 %v17
    %249 = vmatprep.subr.mxu0 0.0
    %250 = vmatpush1.msra.mxu0 %v18
    %251 = vmatprep.subr.mxu0 0.0
    %252 = vmatpush1.msra.mxu0 %v19
    %253 = vmatprep.subr.mxu0 0.0
    %254 = vmatpush1.msra.mxu0 0.0
    %255 = vmatprep.subr.mxu0 0.0
    %256 = vmatpush1.msra.mxu0 0.0
    %257 = vmatprep.subr.mxu0 0.0
    %258 = vmatpush1.msra.mxu0 0.0
    %259 = vmatprep.subr.mxu0 0.0
    %260 = vmatpush1.msra.mxu0 0.0
    %261 = vmatprep.subr.mxu0 0.0
    %262 = vmatpush1.msra.mxu0 0.0
    %263 = vmatprep.subr.mxu0 0.0
    %264 = vmatpush1.msra.mxu0 0.0
    %265 = vmatprep.subr.mxu0 0.0
    %266 = vmatpush1.msra.mxu0 0.0
    %267 = vmatprep.subr.mxu0 0.0
    %268 = vmatpush1.msra.mxu0 0.0
    %269 = vmatprep.subr.mxu0 0.0
    %270 = vmatpush1.msra.mxu0 0.0
    %271 = vmatprep.subr.mxu0 0.0
    %272 = vmatpush1.msra.mxu0 0.0
    %273 = vmatprep.subr.mxu0 0.0
    %274 = vmatpush1.msra.mxu0 0.0
    %275 = vmatprep.subr.mxu0 0.0
    %276 = vmatpush1.msra.mxu0 0.0
    %277 = vmatprep.subr.mxu0 0.0
    %278 = vmatpush1.msra.mxu0 0.0
    %279 = vmatprep.subr.mxu0 0.0
    %280 = vmatpush1.msra.mxu0 0.0
    %281 = vmatprep.subr.mxu0 0.0
    %282 = vmatpush1.msra.mxu0 0.0
    %283 = vmatprep.subr.mxu0 0.0
    %284 = vmatpush1.msra.mxu0 0.0
    %285 = vmatprep.subr.mxu0 0.0
    %286 = vmatpush1.msra.mxu0 0.0
    %287 = vmatprep.subr.mxu0 0.0
    %288 = vmatpush1.msra.mxu0 0.0
    %289 = vmatprep.subr.mxu0 0.0
    %290 = vmatpush1.msra.mxu0 0.0
    %291 = vmatprep.subr.mxu0 0.0
    %292 = vmatpush1.msra.mxu0 0.0
    %293 = vmatprep.subr.mxu0 0.0
    %294 = vmatpush1.msra.mxu0 0.0
    %295 = vmatprep.subr.mxu0 0.0
    %296 = vmatpush1.msra.mxu0 0.0
    %297 = vmatprep.subr.mxu0 0.0
    %298 = vmatpush1.msra.mxu0 0.0
    %299 = vmatprep.subr.mxu0 0.0
    %300 = vmatpush1.msra.mxu0 0.0
    %301 = vmatprep.subr.mxu0 0.0
    %302 = vmatpush1.msra.mxu0 0.0
    %303 = vmatprep.subr.mxu0 0.0
    %304 = vmatpush1.msra.mxu0 0.0
    %305 = vmatprep.subr.mxu0 0.0
    %306 = vmatpush1.msra.mxu0 0.0
    %307 = vmatprep.subr.mxu0 0.0
    %308 = vmatpush1.msra.mxu0 0.0
    %309 = vmatprep.mubr.f32.mxu0 0.0
    %310 = vmatmul.mubr.f32.gmra.mrb[0].mxu0 %v243
    %v311 = vpop.f32.mrb[0].mxu0
    %v312 = vadd.f32 %v24, %v311
    %v313 = vpop.f32.mrb[0].mxu0
    %314 = vdwg.mxu0
    %v316 = vrot.slane %v312, 6
    %v318 = vadd.f32 %v128, %v316
    %v319 = vmul.f32 %v318, 0.5
    %v320 = vtanh.pop %v319
    %v321 = vmul.f32 %v320, 0.5
    %v322 = vadd.f32 %v321, 0.5
    %323 = vrot.lane.b32.xlu0 %v316, 64
    %v324 = vpop.permute.xlu0 %323
    %v326 = vmul.f32 %v322, %v324
    %328 = vrot.lane.b32.xlu0 %v326, 64
    %v329 = vpop.permute.xlu0 %328
    %v331 = vadd.f32 %v128, %v329
    %v332 = vtanh.pop %v331
    %v333 = vsub.f32 1.0, %v322
    %335 = vrot.lane.b32.xlu0 %v332, 96
    %v336 = vpop.permute.xlu0 %335
    %v338 = vmul.f32 %v333, %v336
    %v339 = vrot.slane %v239, 6
    %v341 = vmul.f32 %v322, %v339
    %v342 = vadd.f32 %v338, %v341
    %343 = vmatprep.subr.mxu0 0.0
    %344 = vmatpush1.msra.mxu0 %v25
    %345 = vmatprep.subr.mxu0 0.0
    %346 = vmatpush1.msra.mxu0 %v26
    %347 = vmatprep.subr.mxu0 0.0
    %348 = vmatpush1.msra.mxu0 %v27
    %349 = vmatprep.subr.mxu0 0.0
    %350 = vmatpush1.msra.mxu0 %v28
    %351 = vmatprep.subr.mxu0 0.0
    %352 = vmatpush1.msra.mxu0 0.0
    %353 = vmatprep.subr.mxu0 0.0
    %354 = vmatpush1.msra.mxu0 0.0
    %355 = vmatprep.subr.mxu0 0.0
    %356 = vmatpush1.msra.mxu0 0.0
    %357 = vmatprep.subr.mxu0 0.0
    %358 = vmatpush1.msra.mxu0 0.0
    %359 = vmatprep.subr.mxu0 0.0
    %360 = vmatpush1.msra.mxu0 0.0
    %361 = vmatprep.subr.mxu0 0.0
    %362 = vmatpush1.msra.mxu0 0.0
    %363 = vmatprep.subr.mxu0 0.0
    %364 = vmatpush1.msra.mxu0 0.0
    %365 = vmatprep.subr.mxu0 0.0
    %366 = vmatpush1.msra.mxu0 0.0
    %367 = vmatprep.subr.mxu0 0.0
    %368 = vmatpush1.msra.mxu0 0.0
    %369 = vmatprep.subr.mxu0 0.0
    %370 = vmatpush1.msra.mxu0 0.0
    %371 = vmatprep.subr.mxu0 0.0
    %372 = vmatpush1.msra.mxu0 0.0
    %373 = vmatprep.subr.mxu0 0.0
    %374 = vmatpush1.msra.mxu0 0.0
    %375 = vmatprep.subr.mxu0 0.0
    %376 = vmatpush1.msra.mxu0 0.0
    %377 = vmatprep.subr.mxu0 0.0
    %378 = vmatpush1.msra.mxu0 0.0
    %379 = vmatprep.subr.mxu0 0.0
    %380 = vmatpush1.msra.mxu0 0.0
    %381 = vmatprep.subr.mxu0 0.0
    %382 = vmatpush1.msra.mxu0 0.0
    %383 = vmatprep.subr.mxu0 0.0
    %384 = vmatpush1.msra.mxu0 0.0
    %385 = vmatprep.subr.mxu0 0.0
    %386 = vmatpush1.msra.mxu0 0.0
    %387 = vmatprep.subr.mxu0 0.0
    %388 = vmatpush1.msra.mxu0 0.0
    %389 = vmatprep.subr.mxu0 0.0
    %390 = vmatpush1.msra.mxu0 0.0
    %391 = vmatprep.subr.mxu0 0.0
    %392 = vmatpush1.msra.mxu0 0.0
    %393 = vmatprep.subr.mxu0 0.0
    %394 = vmatpush1.msra.mxu0 0.0
    %395 = vmatprep.subr.mxu0 0.0
    %396 = vmatpush1.msra.mxu0 0.0
    %397 = vmatprep.subr.mxu0 0.0
    %398 = vmatpush1.msra.mxu0 0.0
    %399 = vmatprep.subr.mxu0 0.0
    %400 = vmatpush1.msra.mxu0 0.0
    %401 = vmatprep.subr.mxu0 0.0
    %402 = vmatpush1.msra.mxu0 0.0
    %403 = vmatprep.subr.mxu0 0.0
    %404 = vmatpush1.msra.mxu0 0.0
    %405 = vmatprep.subr.mxu0 0.0
    %406 = vmatpush1.msra.mxu0 0.0
    %407 = vmatprep.mubr.f32.mxu0 0.0
    %408 = vmatmul.mubr.f32.gmra.mrb[0].mxu0 %v243
    %v409 = vpop.f32.mrb[0].mxu0
    %v410 = vadd.f32 %v37, %v409
    %v411 = vpop.f32.mrb[0].mxu0
    %412 = vdwg.mxu0
    %v414 = vsel %vm139, %v138, 0
    %416 = vmatprep.subr.mxu0 0.0
    %417 = vmatpush1.msra.mxu0 %v29
    %418 = vmatprep.subr.mxu0 0.0
    %419 = vmatpush1.msra.mxu0 %v30
    %420 = vmatprep.subr.mxu0 0.0
    %421 = vmatpush1.msra.mxu0 %v31
    %422 = vmatprep.subr.mxu0 0.0
    %423 = vmatpush1.msra.mxu0 %v32
    %424 = vmatprep.subr.mxu0 0.0
    %425 = vmatpush1.msra.mxu0 0.0
    %426 = vmatprep.subr.mxu0 0.0
    %427 = vmatpush1.msra.mxu0 0.0
    %428 = vmatprep.subr.mxu0 0.0
    %429 = vmatpush1.msra.mxu0 0.0
    %430 = vmatprep.subr.mxu0 0.0
    %431 = vmatpush1.msra.mxu0 0.0
    %432 = vmatprep.subr.mxu0 0.0
    %433 = vmatpush1.msra.mxu0 0.0
    %434 = vmatprep.subr.mxu0 0.0
    %435 = vmatpush1.msra.mxu0 0.0
    %436 = vmatprep.subr.mxu0 0.0
    %437 = vmatpush1.msra.mxu0 0.0
    %438 = vmatprep.subr.mxu0 0.0
    %439 = vmatpush1.msra.mxu0 0.0
    %440 = vmatprep.subr.mxu0 0.0
    %441 = vmatpush1.msra.mxu0 0.0
    %442 = vmatprep.subr.mxu0 0.0
    %443 = vmatpush1.msra.mxu0 0.0
    %444 = vmatprep.subr.mxu0 0.0
    %445 = vmatpush1.msra.mxu0 0.0
    %446 = vmatprep.subr.mxu0 0.0
    %447 = vmatpush1.msra.mxu0 0.0
    %448 = vmatprep.subr.mxu0 0.0
    %449 = vmatpush1.msra.mxu0 0.0
    %450 = vmatprep.subr.mxu0 0.0
    %451 = vmatpush1.msra.mxu0 0.0
    %452 = vmatprep.subr.mxu0 0.0
    %453 = vmatpush1.msra.mxu0 0.0
    %454 = vmatprep.subr.mxu0 0.0
    %455 = vmatpush1.msra.mxu0 0.0
    %456 = vmatprep.subr.mxu0 0.0
    %457 = vmatpush1.msra.mxu0 0.0
    %458 = vmatprep.subr.mxu0 0.0
    %459 = vmatpush1.msra.mxu0 0.0
    %460 = vmatprep.subr.mxu0 0.0
    %461 = vmatpush1.msra.mxu0 0.0
    %462 = vmatprep.subr.mxu0 0.0
    %463 = vmatpush1.msra.mxu0 0.0
    %464 = vmatprep.subr.mxu0 0.0
    %465 = vmatpush1.msra.mxu0 0.0
    %466 = vmatprep.subr.mxu0 0.0
    %467 = vmatpush1.msra.mxu0 0.0
    %468 = vmatprep.subr.mxu0 0.0
    %469 = vmatpush1.msra.mxu0 0.0
    %470 = vmatprep.subr.mxu0 0.0
    %471 = vmatpush1.msra.mxu0 0.0
    %472 = vmatprep.subr.mxu0 0.0
    %473 = vmatpush1.msra.mxu0 0.0
    %474 = vmatprep.subr.mxu0 0.0
    %475 = vmatpush1.msra.mxu0 0.0
    %476 = vmatprep.subr.mxu0 0.0
    %477 = vmatpush1.msra.mxu0 0.0
    %478 = vmatprep.subr.mxu0 0.0
    %479 = vmatpush1.msra.mxu0 0.0
    %480 = vmatprep.mubr.f32.mxu0 0.0
    %481 = vmatmul.mubr.f32.gmra.mrb[0].mxu0 %v414
    %v482 = vpop.f32.mrb[0].mxu0
    %v483 = vadd.f32 %v42, %v482
    %v484 = vpop.f32.mrb[0].mxu0
    %485 = vdwg.mxu0
    %v486 = vadd.f32 %v410, %v483
    %v487 = vmul.f32 %v486, 0.5
    %v488 = vtanh.pop %v487
    %v489 = vmul.f32 %v488, 0.5
    %v490 = vadd.f32 %v489, 0.5
    %492 = vrot.lane.b32.xlu0 %v483, 64
    %v493 = vpop.permute.xlu0 %492
    %v495 = vmul.f32 %v490, %v493
    %497 = vrot.lane.b32.xlu0 %v495, 64
    %v498 = vpop.permute.xlu0 %497
    %v500 = vadd.f32 %v410, %v498
    %v501 = vtanh.pop %v500
    %v502 = vsub.f32 1.0, %v490
    %504 = vrot.lane.b32.xlu0 %v501, 96
    %v505 = vpop.permute.xlu0 %504
    %v507 = vmul.f32 %v502, %v505
    %508 = vrot.lane.b32.xlu0 %v138, 32
    %v509 = vpop.permute.xlu0 %508
    %v511 = vmul.f32 %v490, %v509
    %v512 = vadd.f32 %v507, %v511
    %v514 = vrot.slane %v342, 2
    %515 = vrot.lane.b32.xlu0 %v514, 96
    %v516 = vpop.permute.xlu0 %515
    %v517 = vsel %vm139, %v516, 0
    %519 = vmatprep.subr.mxu0 0.0
    %520 = vmatpush1.msra.mxu0 %v16
    %521 = vmatprep.subr.mxu0 0.0
    %522 = vmatpush1.msra.mxu0 %v17
    %523 = vmatprep.subr.mxu0 0.0
    %524 = vmatpush1.msra.mxu0 %v18
    %525 = vmatprep.subr.mxu0 0.0
    %526 = vmatpush1.msra.mxu0 %v19
    %527 = vmatprep.subr.mxu0 0.0
    %528 = vmatpush1.msra.mxu0 0.0
    %529 = vmatprep.subr.mxu0 0.0
    %530 = vmatpush1.msra.mxu0 0.0
    %531 = vmatprep.subr.mxu0 0.0
    %532 = vmatpush1.msra.mxu0 0.0
    %533 = vmatprep.subr.mxu0 0.0
    %534 = vmatpush1.msra.mxu0 0.0
    %535 = vmatprep.subr.mxu0 0.0
    %536 = vmatpush1.msra.mxu0 0.0
    %537 = vmatprep.subr.mxu0 0.0
    %538 = vmatpush1.msra.mxu0 0.0
    %539 = vmatprep.subr.mxu0 0.0
    %540 = vmatpush1.msra.mxu0 0.0
    %541 = vmatprep.subr.mxu0 0.0
    %542 = vmatpush1.msra.mxu0 0.0
    %543 = vmatprep.subr.mxu0 0.0
    %544 = vmatpush1.msra.mxu0 0.0
    %545 = vmatprep.subr.mxu0 0.0
    %546 = vmatpush1.msra.mxu0 0.0
    %547 = vmatprep.subr.mxu0 0.0
    %548 = vmatpush1.msra.mxu0 0.0
    %549 = vmatprep.subr.mxu0 0.0
    %550 = vmatpush1.msra.mxu0 0.0
    %551 = vmatprep.subr.mxu0 0.0
    %552 = vmatpush1.msra.mxu0 0.0
    %553 = vmatprep.subr.mxu0 0.0
    %554 = vmatpush1.msra.mxu0 0.0
    %555 = vmatprep.subr.mxu0 0.0
    %556 = vmatpush1.msra.mxu0 0.0
    %557 = vmatprep.subr.mxu0 0.0
    %558 = vmatpush1.msra.mxu0 0.0
    %559 = vmatprep.subr.mxu0 0.0
    %560 = vmatpush1.msra.mxu0 0.0
    %561 = vmatprep.subr.mxu0 0.0
    %562 = vmatpush1.msra.mxu0 0.0
    %563 = vmatprep.subr.mxu0 0.0
    %564 = vmatpush1.msra.mxu0 0.0
    %565 = vmatprep.subr.mxu0 0.0
    %566 = vmatpush1.msra.mxu0 0.0
    %567 = vmatprep.subr.mxu0 0.0
    %568 = vmatpush1.msra.mxu0 0.0
    %569 = vmatprep.subr.mxu0 0.0
    %570 = vmatpush1.msra.mxu0 0.0
    %571 = vmatprep.subr.mxu0 0.0
    %572 = vmatpush1.msra.mxu0 0.0
    %573 = vmatprep.subr.mxu0 0.0
    %574 = vmatpush1.msra.mxu0 0.0
    %575 = vmatprep.subr.mxu0 0.0
    %576 = vmatpush1.msra.mxu0 0.0
    %577 = vmatprep.subr.mxu0 0.0
    %578 = vmatpush1.msra.mxu0 0.0
    %579 = vmatprep.subr.mxu0 0.0
    %580 = vmatpush1.msra.mxu0 0.0
    %581 = vmatprep.subr.mxu0 0.0
    %582 = vmatpush1.msra.mxu0 0.0
    %583 = vmatprep.mubr.f32.mxu0 0.0
    %584 = vmatmul.mubr.f32.gmra.mrb[0].mxu0 %v517
    %v585 = vpop.f32.mrb[0].mxu0
    %v586 = vadd.f32 %v24, %v585
    %v587 = vpop.f32.mrb[0].mxu0
    %588 = vdwg.mxu0
    %v590 = vrot.slane %v586, 4
    %v592 = vadd.f32 %v128, %v590
    %v593 = vmul.f32 %v592, 0.5
    %v594 = vtanh.pop %v593
    %v595 = vmul.f32 %v594, 0.5
    %v596 = vadd.f32 %v595, 0.5
    %597 = vrot.lane.b32.xlu0 %v590, 64
    %v598 = vpop.permute.xlu0 %597
    %v600 = vmul.f32 %v596, %v598
    %602 = vrot.lane.b32.xlu0 %v600, 64
    %v603 = vpop.permute.xlu0 %602
    %v605 = vadd.f32 %v128, %v603
    %v606 = vtanh.pop %v605
    %v607 = vsub.f32 1.0, %v596
    %609 = vrot.lane.b32.xlu0 %v606, 96
    %v610 = vpop.permute.xlu0 %609
    %v612 = vmul.f32 %v607, %v610
    %v613 = vrot.slane %v342, 6
    %v615 = vmul.f32 %v596, %v613
    %v616 = vadd.f32 %v612, %v615
    %617 = vmatprep.subr.mxu0 0.0
    %618 = vmatpush1.msra.mxu0 %v25
    %619 = vmatprep.subr.mxu0 0.0
    %620 = vmatpush1.msra.mxu0 %v26
    %621 = vmatprep.subr.mxu0 0.0
    %622 = vmatpush1.msra.mxu0 %v27
    %623 = vmatprep.subr.mxu0 0.0
    %624 = vmatpush1.msra.mxu0 %v28
    %625 = vmatprep.subr.mxu0 0.0
    %626 = vmatpush1.msra.mxu0 0.0
    %627 = vmatprep.subr.mxu0 0.0
    %628 = vmatpush1.msra.mxu0 0.0
    %629 = vmatprep.subr.mxu0 0.0
    %630 = vmatpush1.msra.mxu0 0.0
    %631 = vmatprep.subr.mxu0 0.0
    %632 = vmatpush1.msra.mxu0 0.0
    %633 = vmatprep.subr.mxu0 0.0
    %634 = vmatpush1.msra.mxu0 0.0
    %635 = vmatprep.subr.mxu0 0.0
    %636 = vmatpush1.msra.mxu0 0.0
    %637 = vmatprep.subr.mxu0 0.0
    %638 = vmatpush1.msra.mxu0 0.0
    %639 = vmatprep.subr.mxu0 0.0
    %640 = vmatpush1.msra.mxu0 0.0
    %641 = vmatprep.subr.mxu0 0.0
    %642 = vmatpush1.msra.mxu0 0.0
    %643 = vmatprep.subr.mxu0 0.0
    %644 = vmatpush1.msra.mxu0 0.0
    %645 = vmatprep.subr.mxu0 0.0
    %646 = vmatpush1.msra.mxu0 0.0
    %647 = vmatprep.subr.mxu0 0.0
    %648 = vmatpush1.msra.mxu0 0.0
    %649 = vmatprep.subr.mxu0 0.0
    %650 = vmatpush1.msra.mxu0 0.0
    %651 = vmatprep.subr.mxu0 0.0
    %652 = vmatpush1.msra.mxu0 0.0
    %653 = vmatprep.subr.mxu0 0.0
    %654 = vmatpush1.msra.mxu0 0.0
    %655 = vmatprep.subr.mxu0 0.0
    %656 = vmatpush1.msra.mxu0 0.0
    %657 = vmatprep.subr.mxu0 0.0
    %658 = vmatpush1.msra.mxu0 0.0
    %659 = vmatprep.subr.mxu0 0.0
    %660 = vmatpush1.msra.mxu0 0.0
    %661 = vmatprep.subr.mxu0 0.0
    %662 = vmatpush1.msra.mxu0 0.0
    %663 = vmatprep.subr.mxu0 0.0
    %664 = vmatpush1.msra.mxu0 0.0
    %665 = vmatprep.subr.mxu0 0.0
    %666 = vmatpush1.msra.mxu0 0.0
    %667 = vmatprep.subr.mxu0 0.0
    %668 = vmatpush1.msra.mxu0 0.0
    %669 = vmatprep.subr.mxu0 0.0
    %670 = vmatpush1.msra.mxu0 0.0
    %671 = vmatprep.subr.mxu0 0.0
    %672 = vmatpush1.msra.mxu0 0.0
    %673 = vmatprep.subr.mxu0 0.0
    %674 = vmatpush1.msra.mxu0 0.0
    %675 = vmatprep.subr.mxu0 0.0
    %676 = vmatpush1.msra.mxu0 0.0
    %677 = vmatprep.subr.mxu0 0.0
    %678 = vmatpush1.msra.mxu0 0.0
    %679 = vmatprep.subr.mxu0 0.0
    %680 = vmatpush1.msra.mxu0 0.0
    %681 = vmatprep.mubr.f32.mxu0 0.0
    %682 = vmatmul.mubr.f32.gmra.mrb[0].mxu0 %v517
    %v683 = vpop.f32.mrb[0].mxu0
    %v684 = vadd.f32 %v37, %v683
    %v685 = vpop.f32.mrb[0].mxu0
    %686 = vdwg.mxu0
    %688 = vrot.lane.b32.xlu0 %v512, 96
    %v689 = vpop.permute.xlu0 %688
    %v690 = vsel %vm139, %v689, 0
    %692 = vmatprep.subr.mxu0 0.0
    %693 = vmatpush1.msra.mxu0 %v29
    %694 = vmatprep.subr.mxu0 0.0
    %695 = vmatpush1.msra.mxu0 %v30
    %696 = vmatprep.subr.mxu0 0.0
    %697 = vmatpush1.msra.mxu0 %v31
    %698 = vmatprep.subr.mxu0 0.0
    %699 = vmatpush1.msra.mxu0 %v32
    %700 = vmatprep.subr.mxu0 0.0
    %701 = vmatpush1.msra.mxu0 0.0
    %702 = vmatprep.subr.mxu0 0.0
    %703 = vmatpush1.msra.mxu0 0.0
    %704 = vmatprep.subr.mxu0 0.0
    %705 = vmatpush1.msra.mxu0 0.0
    %706 = vmatprep.subr.mxu0 0.0
    %707 = vmatpush1.msra.mxu0 0.0
    %708 = vmatprep.subr.mxu0 0.0
    %709 = vmatpush1.msra.mxu0 0.0
    %710 = vmatprep.subr.mxu0 0.0
    %711 = vmatpush1.msra.mxu0 0.0
    %712 = vmatprep.subr.mxu0 0.0
    %713 = vmatpush1.msra.mxu0 0.0
    %714 = vmatprep.subr.mxu0 0.0
    %715 = vmatpush1.msra.mxu0 0.0
    %716 = vmatprep.subr.mxu0 0.0
    %717 = vmatpush1.msra.mxu0 0.0
    %718 = vmatprep.subr.mxu0 0.0
    %719 = vmatpush1.msra.mxu0 0.0
    %720 = vmatprep.subr.mxu0 0.0
    %721 = vmatpush1.msra.mxu0 0.0
    %722 = vmatprep.subr.mxu0 0.0
    %723 = vmatpush1.msra.mxu0 0.0
    %724 = vmatprep.subr.mxu0 0.0
    %725 = vmatpush1.msra.mxu0 0.0
    %726 = vmatprep.subr.mxu0 0.0
    %727 = vmatpush1.msra.mxu0 0.0
    %728 = vmatprep.subr.mxu0 0.0
    %729 = vmatpush1.msra.mxu0 0.0
    %730 = vmatprep.subr.mxu0 0.0
    %731 = vmatpush1.msra.mxu0 0.0
    %732 = vmatprep.subr.mxu0 0.0
    %733 = vmatpush1.msra.mxu0 0.0
    %734 = vmatprep.subr.mxu0 0.0
    %735 = vmatpush1.msra.mxu0 0.0
    %736 = vmatprep.subr.mxu0 0.0
    %737 = vmatpush1.msra.mxu0 0.0
    %738 = vmatprep.subr.mxu0 0.0
    %739 = vmatpush1.msra.mxu0 0.0
    %740 = vmatprep.subr.mxu0 0.0
    %741 = vmatpush1.msra.mxu0 0.0
    %742 = vmatprep.subr.mxu0 0.0
    %743 = vmatpush1.msra.mxu0 0.0
    %744 = vmatprep.subr.mxu0 0.0
    %745 = vmatpush1.msra.mxu0 0.0
    %746 = vmatprep.subr.mxu0 0.0
    %747 = vmatpush1.msra.mxu0 0.0
    %748 = vmatprep.subr.mxu0 0.0
    %749 = vmatpush1.msra.mxu0 0.0
    %750 = vmatprep.subr.mxu0 0.0
    %751 = vmatpush1.msra.mxu0 0.0
    %752 = vmatprep.subr.mxu0 0.0
    %753 = vmatpush1.msra.mxu0 0.0
    %754 = vmatprep.subr.mxu0 0.0
    %755 = vmatpush1.msra.mxu0 0.0
    %756 = vmatprep.mubr.f32.mxu0 0.0
    %757 = vmatmul.mubr.f32.gmra.mrb[0].mxu0 %v690
    %v758 = vpop.f32.mrb[0].mxu0
    %v759 = vadd.f32 %v42, %v758
    %v760 = vpop.f32.mrb[0].mxu0
    %761 = vdwg.mxu0
    %v762 = vadd.f32 %v684, %v759
    %v763 = vmul.f32 %v762, 0.5
    %v764 = vtanh.pop %v763
    %v765 = vmul.f32 %v764, 0.5
    %v766 = vadd.f32 %v765, 0.5
    %768 = vrot.lane.b32.xlu0 %v759, 64
    %v769 = vpop.permute.xlu0 %768
    %v771 = vmul.f32 %v766, %v769
    %773 = vrot.lane.b32.xlu0 %v771, 64
    %v774 = vpop.permute.xlu0 %773
    %v776 = vadd.f32 %v684, %v774
    %v777 = vtanh.pop %v776
    %v778 = vsub.f32 1.0, %v766
    %780 = vrot.lane.b32.xlu0 %v777, 96
    %v781 = vpop.permute.xlu0 %780
    %v783 = vmul.f32 %v778, %v781
    %v784 = vmul.f32 %v766, %v512
    %v785 = vadd.f32 %v783, %v784
    %v787 = vrot.slane %v616, 4
    %788 = vrot.lane.b32.xlu0 %v787, 96
    %v789 = vpop.permute.xlu0 %788
    %v790 = vsel %vm139, %v789, 0
    %792 = vmatprep.subr.mxu0 0.0
    %793 = vmatpush1.msra.mxu0 %v16
    %794 = vmatprep.subr.mxu0 0.0
    %795 = vmatpush1.msra.mxu0 %v17
    %796 = vmatprep.subr.mxu0 0.0
    %797 = vmatpush1.msra.mxu0 %v18
    %798 = vmatprep.subr.mxu0 0.0
    %799 = vmatpush1.msra.mxu0 %v19
    %800 = vmatprep.subr.mxu0 0.0
    %801 = vmatpush1.msra.mxu0 0.0
    %802 = vmatprep.subr.mxu0 0.0
    %803 = vmatpush1.msra.mxu0 0.0
    %804 = vmatprep.subr.mxu0 0.0
    %805 = vmatpush1.msra.mxu0 0.0
    %806 = vmatprep.subr.mxu0 0.0
    %807 = vmatpush1.msra.mxu0 0.0
    %808 = vmatprep.subr.mxu0 0.0
    %809 = vmatpush1.msra.mxu0 0.0
    %810 = vmatprep.subr.mxu0 0.0
    %811 = vmatpush1.msra.mxu0 0.0
    %812 = vmatprep.subr.mxu0 0.0
    %813 = vmatpush1.msra.mxu0 0.0
    %814 = vmatprep.subr.mxu0 0.0
    %815 = vmatpush1.msra.mxu0 0.0
    %816 = vmatprep.subr.mxu0 0.0
    %817 = vmatpush1.msra.mxu0 0.0
    %818 = vmatprep.subr.mxu0 0.0
    %819 = vmatpush1.msra.mxu0 0.0
    %820 = vmatprep.subr.mxu0 0.0
    %821 = vmatpush1.msra.mxu0 0.0
    %822 = vmatprep.subr.mxu0 0.0
    %823 = vmatpush1.msra.mxu0 0.0
    %824 = vmatprep.subr.mxu0 0.0
    %825 = vmatpush1.msra.mxu0 0.0
    %826 = vmatprep.subr.mxu0 0.0
    %827 = vmatpush1.msra.mxu0 0.0
    %828 = vmatprep.subr.mxu0 0.0
    %829 = vmatpush1.msra.mxu0 0.0
    %830 = vmatprep.subr.mxu0 0.0
    %831 = vmatpush1.msra.mxu0 0.0
    %832 = vmatprep.subr.mxu0 0.0
    %833 = vmatpush1.msra.mxu0 0.0
    %834 = vmatprep.subr.mxu0 0.0
    %835 = vmatpush1.msra.mxu0 0.0
    %836 = vmatprep.subr.mxu0 0.0
    %837 = vmatpush1.msra.mxu0 0.0
    %838 = vmatprep.subr.mxu0 0.0
    %839 = vmatpush1.msra.mxu0 0.0
    %840 = vmatprep.subr.mxu0 0.0
    %841 = vmatpush1.msra.mxu0 0.0
    %842 = vmatprep.subr.mxu0 0.0
    %843 = vmatpush1.msra.mxu0 0.0
    %844 = vmatprep.subr.mxu0 0.0
    %845 = vmatpush1.msra.mxu0 0.0
    %846 = vmatprep.subr.mxu0 0.0
    %847 = vmatpush1.msra.mxu0 0.0
    %848 = vmatprep.subr.mxu0 0.0
    %849 = vmatpush1.msra.mxu0 0.0
    %850 = vmatprep.subr.mxu0 0.0
    %851 = vmatpush1.msra.mxu0 0.0
    %852 = vmatprep.subr.mxu0 0.0
    %853 = vmatpush1.msra.mxu0 0.0
    %854 = vmatprep.subr.mxu0 0.0
    %855 = vmatpush1.msra.mxu0 0.0
    %856 = vmatprep.mubr.f32.mxu0 0.0
    %857 = vmatmul.mubr.f32.gmra.mrb[0].mxu0 %v790
    %v858 = vpop.f32.mrb[0].mxu0
    %v859 = vadd.f32 %v24, %v858
    %v860 = vpop.f32.mrb[0].mxu0
    %861 = vdwg.mxu0
    %v863 = vrot.slane %v859, 2
    %v865 = vadd.f32 %v128, %v863
    %v866 = vmul.f32 %v865, 0.5
    %v867 = vtanh.pop %v866
    %v868 = vmul.f32 %v867, 0.5
    %v869 = vadd.f32 %v868, 0.5
    %870 = vrot.lane.b32.xlu0 %v863, 64
    %v871 = vpop.permute.xlu0 %870
    %v873 = vmul.f32 %v869, %v871
    %875 = vrot.lane.b32.xlu0 %v873, 64
    %v876 = vpop.permute.xlu0 %875
    %v878 = vadd.f32 %v128, %v876
    %v879 = vtanh.pop %v878
    %v880 = vsub.f32 1.0, %v869
    %882 = vrot.lane.b32.xlu0 %v879, 96
    %v883 = vpop.permute.xlu0 %882
    %v885 = vmul.f32 %v880, %v883
    %v886 = vrot.slane %v616, 6
    %v888 = vmul.f32 %v869, %v886
    %v889 = vadd.f32 %v885, %v888
    %890 = vmatprep.subr.mxu0 0.0
    %891 = vmatpush1.msra.mxu0 %v25
    %892 = vmatprep.subr.mxu0 0.0
    %893 = vmatpush1.msra.mxu0 %v26
    %894 = vmatprep.subr.mxu0 0.0
    %895 = vmatpush1.msra.mxu0 %v27
    %896 = vmatprep.subr.mxu0 0.0
    %897 = vmatpush1.msra.mxu0 %v28
    %898 = vmatprep.subr.mxu0 0.0
    %899 = vmatpush1.msra.mxu0 0.0
    %900 = vmatprep.subr.mxu0 0.0
    %901 = vmatpush1.msra.mxu0 0.0
    %902 = vmatprep.subr.mxu0 0.0
    %903 = vmatpush1.msra.mxu0 0.0
    %904 = vmatprep.subr.mxu0 0.0
    %905 = vmatpush1.msra.mxu0 0.0
    %906 = vmatprep.subr.mxu0 0.0
    %907 = vmatpush1.msra.mxu0 0.0
    %908 = vmatprep.subr.mxu0 0.0
    %909 = vmatpush1.msra.mxu0 0.0
    %910 = vmatprep.subr.mxu0 0.0
    %911 = vmatpush1.msra.mxu0 0.0
    %912 = vmatprep.subr.mxu0 0.0
    %913 = vmatpush1.msra.mxu0 0.0
    %914 = vmatprep.subr.mxu0 0.0
    %915 = vmatpush1.msra.mxu0 0.0
    %916 = vmatprep.subr.mxu0 0.0
    %917 = vmatpush1.msra.mxu0 0.0
    %918 = vmatprep.subr.mxu0 0.0
    %919 = vmatpush1.msra.mxu0 0.0
    %920 = vmatprep.subr.mxu0 0.0
    %921 = vmatpush1.msra.mxu0 0.0
    %922 = vmatprep.subr.mxu0 0.0
    %923 = vmatpush1.msra.mxu0 0.0
    %924 = vmatprep.subr.mxu0 0.0
    %925 = vmatpush1.msra.mxu0 0.0
    %926 = vmatprep.subr.mxu0 0.0
    %927 = vmatpush1.msra.mxu0 0.0
    %928 = vmatprep.subr.mxu0 0.0
    %929 = vmatpush1.msra.mxu0 0.0
    %930 = vmatprep.subr.mxu0 0.0
    %931 = vmatpush1.msra.mxu0 0.0
    %932 = vmatprep.subr.mxu0 0.0
    %933 = vmatpush1.msra.mxu0 0.0
    %934 = vmatprep.subr.mxu0 0.0
    %935 = vmatpush1.msra.mxu0 0.0
    %936 = vmatprep.subr.mxu0 0.0
    %937 = vmatpush1.msra.mxu0 0.0
    %938 = vmatprep.subr.mxu0 0.0
    %939 = vmatpush1.msra.mxu0 0.0
    %940 = vmatprep.subr.mxu0 0.0
    %941 = vmatpush1.msra.mxu0 0.0
    %942 = vmatprep.subr.mxu0 0.0
    %943 = vmatpush1.msra.mxu0 0.0
    %944 = vmatprep.subr.mxu0 0.0
    %945 = vmatpush1.msra.mxu0 0.0
    %946 = vmatprep.subr.mxu0 0.0
    %947 = vmatpush1.msra.mxu0 0.0
    %948 = vmatprep.subr.mxu0 0.0
    %949 = vmatpush1.msra.mxu0 0.0
    %950 = vmatprep.subr.mxu0 0.0
    %951 = vmatpush1.msra.mxu0 0.0
    %952 = vmatprep.subr.mxu0 0.0
    %953 = vmatpush1.msra.mxu0 0.0
    %954 = vmatprep.mubr.f32.mxu0 0.0
    %955 = vmatmul.mubr.f32.gmra.mrb[0].mxu0 %v790
    %v956 = vpop.f32.mrb[0].mxu0
    %v957 = vadd.f32 %v37, %v956
    %v958 = vpop.f32.mrb[0].mxu0
    %959 = vdwg.mxu0
    %961 = vrot.lane.b32.xlu0 %v785, 96
    %v962 = vpop.permute.xlu0 %961
    %v963 = vsel %vm139, %v962, 0
    %965 = vmatprep.subr.mxu0 0.0
    %966 = vmatpush1.msra.mxu0 %v29
    %967 = vmatprep.subr.mxu0 0.0
    %968 = vmatpush1.msra.mxu0 %v30
    %969 = vmatprep.subr.mxu0 0.0
    %970 = vmatpush1.msra.mxu0 %v31
    %971 = vmatprep.subr.mxu0 0.0
    %972 = vmatpush1.msra.mxu0 %v32
    %973 = vmatprep.subr.mxu0 0.0
    %974 = vmatpush1.msra.mxu0 0.0
    %975 = vmatprep.subr.mxu0 0.0
    %976 = vmatpush1.msra.mxu0 0.0
    %977 = vmatprep.subr.mxu0 0.0
    %978 = vmatpush1.msra.mxu0 0.0
    %979 = vmatprep.subr.mxu0 0.0
    %980 = vmatpush1.msra.mxu0 0.0
    %981 = vmatprep.subr.mxu0 0.0
    %982 = vmatpush1.msra.mxu0 0.0
    %983 = vmatprep.subr.mxu0 0.0
    %984 = vmatpush1.msra.mxu0 0.0
    %985 = vmatprep.subr.mxu0 0.0
    %986 = vmatpush1.msra.mxu0 0.0
    %987 = vmatprep.subr.mxu0 0.0
    %988 = vmatpush1.msra.mxu0 0.0
    %989 = vmatprep.subr.mxu0 0.0
    %990 = vmatpush1.msra.mxu0 0.0
    %991 = vmatprep.subr.mxu0 0.0
    %992 = vmatpush1.msra.mxu0 0.0
    %993 = vmatprep.subr.mxu0 0.0
    %994 = vmatpush1.msra.mxu0 0.0
    %995 = vmatprep.subr.mxu0 0.0
    %996 = vmatpush1.msra.mxu0 0.0
    %997 = vmatprep.subr.mxu0 0.0
    %998 = vmatpush1.msra.mxu0 0.0
    %999 = vmatprep.subr.mxu0 0.0
    %1000 = vmatpush1.msra.mxu0 0.0
    %1001 = vmatprep.subr.mxu0 0.0
    %1002 = vmatpush1.msra.mxu0 0.0
    %1003 = vmatprep.subr.mxu0 0.0
    %1004 = vmatpush1.msra.mxu0 0.0
    %1005 = vmatprep.subr.mxu0 0.0
    %1006 = vmatpush1.msra.mxu0 0.0
    %1007 = vmatprep.subr.mxu0 0.0
    %1008 = vmatpush1.msra.mxu0 0.0
    %1009 = vmatprep.subr.mxu0 0.0
    %1010 = vmatpush1.msra.mxu0 0.0
    %1011 = vmatprep.subr.mxu0 0.0
    %1012 = vmatpush1.msra.mxu0 0.0
    %1013 = vmatprep.subr.mxu0 0.0
    %1014 = vmatpush1.msra.mxu0 0.0
    %1015 = vmatprep.subr.mxu0 0.0
    %1016 = vmatpush1.msra.mxu0 0.0
    %1017 = vmatprep.subr.mxu0 0.0
    %1018 = vmatpush1.msra.mxu0 0.0
    %1019 = vmatprep.subr.mxu0 0.0
    %1020 = vmatpush1.msra.mxu0 0.0
    %1021 = vmatprep.subr.mxu0 0.0
    %1022 = vmatpush1.msra.mxu0 0.0
    %1023 = vmatprep.subr.mxu0 0.0
    %1024 = vmatpush1.msra.mxu0 0.0
    %1025 = vmatprep.subr.mxu0 0.0
    %1026 = vmatpush1.msra.mxu0 0.0
    %1027 = vmatprep.subr.mxu0 0.0
    %1028 = vmatpush1.msra.mxu0 0.0
    %1029 = vmatprep.mubr.f32.mxu0 0.0
    %1030 = vmatmul.mubr.f32.gmra.mrb[0].mxu0 %v963
    %v1031 = vpop.f32.mrb[0].mxu0
    %v1032 = vadd.f32 %v42, %v1031
    %v1033 = vpop.f32.mrb[0].mxu0
    %1034 = vdwg.mxu0
    %v1035 = vadd.f32 %v957, %v1032
    %v1036 = vmul.f32 %v1035, 0.5
    %v1037 = vtanh.pop %v1036
    %v1038 = vmul.f32 %v1037, 0.5
    %v1039 = vadd.f32 %v1038, 0.5
    %1041 = vrot.lane.b32.xlu0 %v1032, 64
    %v1042 = vpop.permute.xlu0 %1041
    %v1044 = vmul.f32 %v1039, %v1042
    %1046 = vrot.lane.b32.xlu0 %v1044, 64
    %v1047 = vpop.permute.xlu0 %1046
    %v1049 = vadd.f32 %v957, %v1047
    %v1050 = vtanh.pop %v1049
    %v1051 = vsub.f32 1.0, %v1039
    %1053 = vrot.lane.b32.xlu0 %v1050, 96
    %v1054 = vpop.permute.xlu0 %1053
    %v1056 = vmul.f32 %v1051, %v1054
    %v1057 = vmul.f32 %v1039, %v785
    %v1058 = vadd.f32 %v1056, %v1057
    %v1060 = vrot.slane %v889, 6
    %1061 = vrot.lane.b32.xlu0 %v1060, 96
    %v1062 = vpop.permute.xlu0 %1061
    %v1063 = vsel %vm139, %v1062, 0
    %1065 = vmatprep.subr.mxu0 0.0
    %1066 = vmatpush1.msra.mxu0 %v16
    %1067 = vmatprep.subr.mxu0 0.0
    %1068 = vmatpush1.msra.mxu0 %v17
    %1069 = vmatprep.subr.mxu0 0.0
    %1070 = vmatpush1.msra.mxu0 %v18
    %1071 = vmatprep.subr.mxu0 0.0
    %1072 = vmatpush1.msra.mxu0 %v19
    %1073 = vmatprep.subr.mxu0 0.0
    %1074 = vmatpush1.msra.mxu0 0.0
    %1075 = vmatprep.subr.mxu0 0.0
    %1076 = vmatpush1.msra.mxu0 0.0
    %1077 = vmatprep.subr.mxu0 0.0
    %1078 = vmatpush1.msra.mxu0 0.0
    %1079 = vmatprep.subr.mxu0 0.0
    %1080 = vmatpush1.msra.mxu0 0.0
    %1081 = vmatprep.subr.mxu0 0.0
    %1082 = vmatpush1.msra.mxu0 0.0
    %1083 = vmatprep.subr.mxu0 0.0
    %1084 = vmatpush1.msra.mxu0 0.0
    %1085 = vmatprep.subr.mxu0 0.0
    %1086 = vmatpush1.msra.mxu0 0.0
    %1087 = vmatprep.subr.mxu0 0.0
    %1088 = vmatpush1.msra.mxu0 0.0
    %1089 = vmatprep.subr.mxu0 0.0
    %1090 = vmatpush1.msra.mxu0 0.0
    %1091 = vmatprep.subr.mxu0 0.0
    %1092 = vmatpush1.msra.mxu0 0.0
    %1093 = vmatprep.subr.mxu0 0.0
    %1094 = vmatpush1.msra.mxu0 0.0
    %1095 = vmatprep.subr.mxu0 0.0
    %1096 = vmatpush1.msra.mxu0 0.0
    %1097 = vmatprep.subr.mxu0 0.0
    %1098 = vmatpush1.msra.mxu0 0.0
    %1099 = vmatprep.subr.mxu0 0.0
    %1100 = vmatpush1.msra.mxu0 0.0
    %1101 = vmatprep.subr.mxu0 0.0
    %1102 = vmatpush1.msra.mxu0 0.0
    %1103 = vmatprep.subr.mxu0 0.0
    %1104 = vmatpush1.msra.mxu0 0.0
    %1105 = vmatprep.subr.mxu0 0.0
    %1106 = vmatpush1.msra.mxu0 0.0
    %1107 = vmatprep.subr.mxu0 0.0
    %1108 = vmatpush1.msra.mxu0 0.0
    %1109 = vmatprep.subr.mxu0 0.0
    %1110 = vmatpush1.msra.mxu0 0.0
    %1111 = vmatprep.subr.mxu0 0.0
    %1112 = vmatpush1.msra.mxu0 0.0
    %1113 = vmatprep.subr.mxu0 0.0
    %1114 = vmatpush1.msra.mxu0 0.0
    %1115 = vmatprep.subr.mxu0 0.0
    %1116 = vmatpush1.msra.mxu0 0.0
    %1117 = vmatprep.subr.mxu0 0.0
    %1118 = vmatpush1.msra.mxu0 0.0
    %1119 = vmatprep.subr.mxu0 0.0
    %1120 = vmatpush1.msra.mxu0 0.0
    %1121 = vmatprep.subr.mxu0 0.0
    %1122 = vmatpush1.msra.mxu0 0.0
    %1123 = vmatprep.subr.mxu0 0.0
    %1124 = vmatpush1.msra.mxu0 0.0
    %1125 = vmatprep.subr.mxu0 0.0
    %1126 = vmatpush1.msra.mxu0 0.0
    %1127 = vmatprep.subr.mxu0 0.0
    %1128 = vmatpush1.msra.mxu0 0.0
    %1129 = vmatprep.mubr.f32.mxu0 0.0
    %1130 = vmatmul.mubr.f32.gmra.mrb[0].mxu0 %v1063
    %v1131 = vpop.f32.mrb[0].mxu0
    %v1132 = vadd.f32 %v24, %v1131
    %v1133 = vpop.f32.mrb[0].mxu0
    %1134 = vdwg.mxu0
    %v1135 = vadd.f32 %v133, %v1132
    %v1136 = vmul.f32 %v1135, 0.5
    %v1137 = vtanh.pop %v1136
    %v1138 = vmul.f32 %v1137, 0.5
    %v1139 = vadd.f32 %v1138, 0.5
    %1141 = vrot.lane.b32.xlu0 %v1132, 64
    %v1142 = vpop.permute.xlu0 %1141
    %v1144 = vmul.f32 %v1139, %v1142
    %1146 = vrot.lane.b32.xlu0 %v1144, 64
    %v1147 = vpop.permute.xlu0 %1146
    %v1149 = vadd.f32 %v133, %v1147
    %v1150 = vtanh.pop %v1149
    %v1151 = vsub.f32 1.0, %v1139
    %1153 = vrot.lane.b32.xlu0 %v1150, 96
    %v1154 = vpop.permute.xlu0 %1153
    %v1156 = vmul.f32 %v1151, %v1154
    %v1158 = vmul.f32 %v1139, %v1060
    %v1159 = vadd.f32 %v1156, %v1158
    %1160 = vmatprep.subr.mxu0 0.0
    %1161 = vmatpush1.msra.mxu0 %v25
    %1162 = vmatprep.subr.mxu0 0.0
    %1163 = vmatpush1.msra.mxu0 %v26
    %1164 = vmatprep.subr.mxu0 0.0
    %1165 = vmatpush1.msra.mxu0 %v27
    %1166 = vmatprep.subr.mxu0 0.0
    %1167 = vmatpush1.msra.mxu0 %v28
    %1168 = vmatprep.subr.mxu0 0.0
    %1169 = vmatpush1.msra.mxu0 0.0
    %1170 = vmatprep.subr.mxu0 0.0
    %1171 = vmatpush1.msra.mxu0 0.0
    %1172 = vmatprep.subr.mxu0 0.0
    %1173 = vmatpush1.msra.mxu0 0.0
    %1174 = vmatprep.subr.mxu0 0.0
    %1175 = vmatpush1.msra.mxu0 0.0
    %1176 = vmatprep.subr.mxu0 0.0
    %1177 = vmatpush1.msra.mxu0 0.0
    %1178 = vmatprep.subr.mxu0 0.0
    %1179 = vmatpush1.msra.mxu0 0.0
    %1180 = vmatprep.subr.mxu0 0.0
    %1181 = vmatpush1.msra.mxu0 0.0
    %1182 = vmatprep.subr.mxu0 0.0
    %1183 = vmatpush1.msra.mxu0 0.0
    %1184 = vmatprep.subr.mxu0 0.0
    %1185 = vmatpush1.msra.mxu0 0.0
    %1186 = vmatprep.subr.mxu0 0.0
    %1187 = vmatpush1.msra.mxu0 0.0
    %1188 = vmatprep.subr.mxu0 0.0
    %1189 = vmatpush1.msra.mxu0 0.0
    %1190 = vmatprep.subr.mxu0 0.0
    %1191 = vmatpush1.msra.mxu0 0.0
    %1192 = vmatprep.subr.mxu0 0.0
    %1193 = vmatpush1.msra.mxu0 0.0
    %1194 = vmatprep.subr.mxu0 0.0
    %1195 = vmatpush1.msra.mxu0 0.0
    %1196 = vmatprep.subr.mxu0 0.0
    %1197 = vmatpush1.msra.mxu0 0.0
    %1198 = vmatprep.subr.mxu0 0.0
    %1199 = vmatpush1.msra.mxu0 0.0
    %1200 = vmatprep.subr.mxu0 0.0
    %1201 = vmatpush1.msra.mxu0 0.0
    %1202 = vmatprep.subr.mxu0 0.0
    %1203 = vmatpush1.msra.mxu0 0.0
    %1204 = vmatprep.subr.mxu0 0.0
    %1205 = vmatpush1.msra.mxu0 0.0
    %1206 = vmatprep.subr.mxu0 0.0
    %1207 = vmatpush1.msra.mxu0 0.0
    %1208 = vmatprep.subr.mxu0 0.0
    %1209 = vmatpush1.msra.mxu0 0.0
    %1210 = vmatprep.subr.mxu0 0.0
    %1211 = vmatpush1.msra.mxu0 0.0
    %1212 = vmatprep.subr.mxu0 0.0
    %1213 = vmatpush1.msra.mxu0 0.0
    %1214 = vmatprep.subr.mxu0 0.0
    %1215 = vmatpush1.msra.mxu0 0.0
    %1216 = vmatprep.subr.mxu0 0.0
    %1217 = vmatpush1.msra.mxu0 0.0
    %1218 = vmatprep.subr.mxu0 0.0
    %1219 = vmatpush1.msra.mxu0 0.0
    %1220 = vmatprep.subr.mxu0 0.0
    %1221 = vmatpush1.msra.mxu0 0.0
    %1222 = vmatprep.subr.mxu0 0.0
    %1223 = vmatpush1.msra.mxu0 0.0
    %1224 = vmatprep.mubr.f32.mxu0 0.0
    %1225 = vmatmul.mubr.f32.gmra.mrb[0].mxu0 %v1063
    %v1226 = vpop.f32.mrb[0].mxu0
    %v1227 = vadd.f32 %v37, %v1226
    %v1228 = vpop.f32.mrb[0].mxu0
    %1229 = vdwg.mxu0
    %1231 = vrot.lane.b32.xlu0 %v1058, 96
    %v1232 = vpop.permute.xlu0 %1231
    %v1233 = vsel %vm139, %v1232, 0
    %1235 = vmatprep.subr.mxu0 0.0
    %1236 = vmatpush1.msra.mxu0 %v29
    %1237 = vmatprep.subr.mxu0 0.0
    %1238 = vmatpush1.msra.mxu0 %v30
    %1239 = vmatprep.subr.mxu0 0.0
    %1240 = vmatpush1.msra.mxu0 %v31
    %1241 = vmatprep.subr.mxu0 0.0
    %1242 = vmatpush1.msra.mxu0 %v32
    %1243 = vmatprep.subr.mxu0 0.0
    %1244 = vmatpush1.msra.mxu0 0.0
    %1245 = vmatprep.subr.mxu0 0.0
    %1246 = vmatpush1.msra.mxu0 0.0
    %1247 = vmatprep.subr.mxu0 0.0
    %1248 = vmatpush1.msra.mxu0 0.0
    %1249 = vmatprep.subr.mxu0 0.0
    %1250 = vmatpush1.msra.mxu0 0.0
    %1251 = vmatprep.subr.mxu0 0.0
    %1252 = vmatpush1.msra.mxu0 0.0
    %1253 = vmatprep.subr.mxu0 0.0
    %1254 = vmatpush1.msra.mxu0 0.0
    %1255 = vmatprep.subr.mxu0 0.0
    %1256 = vmatpush1.msra.mxu0 0.0
    %1257 = vmatprep.subr.mxu0 0.0
    %1258 = vmatpush1.msra.mxu0 0.0
    %1259 = vmatprep.subr.mxu0 0.0
    %1260 = vmatpush1.msra.mxu0 0.0
    %1261 = vmatprep.subr.mxu0 0.0
    %1262 = vmatpush1.msra.mxu0 0.0
    %1263 = vmatprep.subr.mxu0 0.0
    %1264 = vmatpush1.msra.mxu0 0.0
    %1265 = vmatprep.subr.mxu0 0.0
    %1266 = vmatpush1.msra.mxu0 0.0
    %1267 = vmatprep.subr.mxu0 0.0
    %1268 = vmatpush1.msra.mxu0 0.0
    %1269 = vmatprep.subr.mxu0 0.0
    %1270 = vmatpush1.msra.mxu0 0.0
    %1271 = vmatprep.subr.mxu0 0.0
    %1272 = vmatpush1.msra.mxu0 0.0
    %1273 = vmatprep.subr.mxu0 0.0
    %1274 = vmatpush1.msra.mxu0 0.0
    %1275 = vmatprep.subr.mxu0 0.0
    %1276 = vmatpush1.msra.mxu0 0.0
    %1277 = vmatprep.subr.mxu0 0.0
    %1278 = vmatpush1.msra.mxu0 0.0
    %1279 = vmatprep.subr.mxu0 0.0
    %1280 = vmatpush1.msra.mxu0 0.0
    %1281 = vmatprep.subr.mxu0 0.0
    %1282 = vmatpush1.msra.mxu0 0.0
    %1283 = vmatprep.subr.mxu0 0.0
    %1284 = vmatpush1.msra.mxu0 0.0
    %1285 = vmatprep.subr.mxu0 0.0
    %1286 = vmatpush1.msra.mxu0 0.0
    %1287 = vmatprep.subr.mxu0 0.0
    %1288 = vmatpush1.msra.mxu0 0.0
    %1289 = vmatprep.subr.mxu0 0.0
    %1290 = vmatpush1.msra.mxu0 0.0
    %1291 = vmatprep.subr.mxu0 0.0
    %1292 = vmatpush1.msra.mxu0 0.0
    %1293 = vmatprep.subr.mxu0 0.0
    %1294 = vmatpush1.msra.mxu0 0.0
    %1295 = vmatprep.subr.mxu0 0.0
    %1296 = vmatpush1.msra.mxu0 0.0
    %1297 = vmatprep.subr.mxu0 0.0
    %1298 = vmatpush1.msra.mxu0 0.0
    %1299 = vmatprep.mubr.f32.mxu0 0.0
    %1300 = vmatmul.mubr.f32.gmra.mrb[0].mxu0 %v1233
    %v1301 = vpop.f32.mrb[0].mxu0
    %v1302 = vadd.f32 %v42, %v1301
    %v1303 = vpop.f32.mrb[0].mxu0
    %1304 = vdwg.mxu0
    %v1305 = vadd.f32 %v1227, %v1302
    %v1306 = vmul.f32 %v1305, 0.5
    %v1307 = vtanh.pop %v1306
    %v1308 = vmul.f32 %v1307, 0.5
    %v1309 = vadd.f32 %v1308, 0.5
    %1311 = vrot.lane.b32.xlu0 %v1302, 64
    %v1312 = vpop.permute.xlu0 %1311
    %v1314 = vmul.f32 %v1309, %v1312
    %1316 = vrot.lane.b32.xlu0 %v1314, 64
    %v1317 = vpop.permute.xlu0 %1316
    %v1319 = vadd.f32 %v1227, %v1317
    %v1320 = vtanh.pop %v1319
    %v1321 = vsub.f32 1.0, %v1309
    %1323 = vrot.lane.b32.xlu0 %v1320, 96
    %v1324 = vpop.permute.xlu0 %1323
    %v1326 = vmul.f32 %v1321, %v1324
    %v1327 = vmul.f32 %v1309, %v1058
    %v1328 = vadd.f32 %v1326, %v1327
    %1330 = vrot.lane.b32.xlu0 %v1159, 96
    %v1331 = vpop.permute.xlu0 %1330
    %v1332 = vsel %vm139, %v1331, 0
    %1334 = vmatprep.subr.mxu0 0.0
    %1335 = vmatpush1.msra.mxu0 %v16
    %1336 = vmatprep.subr.mxu0 0.0
    %1337 = vmatpush1.msra.mxu0 %v17
    %1338 = vmatprep.subr.mxu0 0.0
    %1339 = vmatpush1.msra.mxu0 %v18
    %1340 = vmatprep.subr.mxu0 0.0
    %1341 = vmatpush1.msra.mxu0 %v19
    %1342 = vmatprep.subr.mxu0 0.0
    %1343 = vmatpush1.msra.mxu0 0.0
    %1344 = vmatprep.subr.mxu0 0.0
    %1345 = vmatpush1.msra.mxu0 0.0
    %1346 = vmatprep.subr.mxu0 0.0
    %1347 = vmatpush1.msra.mxu0 0.0
    %1348 = vmatprep.subr.mxu0 0.0
    %1349 = vmatpush1.msra.mxu0 0.0
    %1350 = vmatprep.subr.mxu0 0.0
    %1351 = vmatpush1.msra.mxu0 0.0
    %1352 = vmatprep.subr.mxu0 0.0
    %1353 = vmatpush1.msra.mxu0 0.0
    %1354 = vmatprep.subr.mxu0 0.0
    %1355 = vmatpush1.msra.mxu0 0.0
    %1356 = vmatprep.subr.mxu0 0.0
    %1357 = vmatpush1.msra.mxu0 0.0
    %1358 = vmatprep.subr.mxu0 0.0
    %1359 = vmatpush1.msra.mxu0 0.0
    %1360 = vmatprep.subr.mxu0 0.0
    %1361 = vmatpush1.msra.mxu0 0.0
    %1362 = vmatprep.subr.mxu0 0.0
    %1363 = vmatpush1.msra.mxu0 0.0
    %1364 = vmatprep.subr.mxu0 0.0
    %1365 = vmatpush1.msra.mxu0 0.0
    %1366 = vmatprep.subr.mxu0 0.0
    %1367 = vmatpush1.msra.mxu0 0.0
    %1368 = vmatprep.subr.mxu0 0.0
    %1369 = vmatpush1.msra.mxu0 0.0
    %1370 = vmatprep.subr.mxu0 0.0
    %1371 = vmatpush1.msra.mxu0 0.0
    %1372 = vmatprep.subr.mxu0 0.0
    %1373 = vmatpush1.msra.mxu0 0.0
    %1374 = vmatprep.subr.mxu0 0.0
    %1375 = vmatpush1.msra.mxu0 0.0
    %1376 = vmatprep.subr.mxu0 0.0
    %1377 = vmatpush1.msra.mxu0 0.0
    %1378 = vmatprep.subr.mxu0 0.0
    %1379 = vmatpush1.msra.mxu0 0.0
    %1380 = vmatprep.subr.mxu0 0.0
    %1381 = vmatpush1.msra.mxu0 0.0
    %1382 = vmatprep.subr.mxu0 0.0
    %1383 = vmatpush1.msra.mxu0 0.0
    %1384 = vmatprep.subr.mxu0 0.0
    %1385 = vmatpush1.msra.mxu0 0.0
    %1386 = vmatprep.subr.mxu0 0.0
    %1387 = vmatpush1.msra.mxu0 0.0
    %1388 = vmatprep.subr.mxu0 0.0
    %1389 = vmatpush1.msra.mxu0 0.0
    %1390 = vmatprep.subr.mxu0 0.0
    %1391 = vmatpush1.msra.mxu0 0.0
    %1392 = vmatprep.subr.mxu0 0.0
    %1393 = vmatpush1.msra.mxu0 0.0
    %1394 = vmatprep.subr.mxu0 0.0
    %1395 = vmatpush1.msra.mxu0 0.0
    %1396 = vmatprep.subr.mxu0 0.0
    %1397 = vmatpush1.msra.mxu0 0.0
    %1398 = vmatprep.mubr.f32.mxu0 0.0
    %1399 = vmatmul.mubr.f32.gmra.mrb[0].mxu0 %v1332
    %v1400 = vpop.f32.mrb[0].mxu0
    %v1401 = vadd.f32 %v24, %v1400
    %v1402 = vpop.f32.mrb[0].mxu0
    %1403 = vdwg.mxu0
    %v1405 = vrot.slane %v1401, 6
    %v1407 = vadd.f32 %v133, %v1405
    %v1408 = vmul.f32 %v1407, 0.5
    %v1409 = vtanh.pop %v1408
    %v1410 = vmul.f32 %v1409, 0.5
    %v1411 = vadd.f32 %v1410, 0.5
    %1412 = vrot.lane.b32.xlu0 %v1405, 64
    %v1413 = vpop.permute.xlu0 %1412
    %v1415 = vmul.f32 %v1411, %v1413
    %1417 = vrot.lane.b32.xlu0 %v1415, 64
    %v1418 = vpop.permute.xlu0 %1417
    %v1420 = vadd.f32 %v133, %v1418
    %v1421 = vtanh.pop %v1420
    %v1422 = vsub.f32 1.0, %v1411
    %1424 = vrot.lane.b32.xlu0 %v1421, 96
    %v1425 = vpop.permute.xlu0 %1424
    %v1427 = vmul.f32 %v1422, %v1425
    %v1428 = vrot.slane %v1159, 6
    %v1430 = vmul.f32 %v1411, %v1428
    %v1431 = vadd.f32 %v1427, %v1430
    %1432 = vmatprep.subr.mxu0 0.0
    %1433 = vmatpush1.msra.mxu0 %v25
    %1434 = vmatprep.subr.mxu0 0.0
    %1435 = vmatpush1.msra.mxu0 %v26
    %1436 = vmatprep.subr.mxu0 0.0
    %1437 = vmatpush1.msra.mxu0 %v27
    %1438 = vmatprep.subr.mxu0 0.0
    %1439 = vmatpush1.msra.mxu0 %v28
    %1440 = vmatprep.subr.mxu0 0.0
    %1441 = vmatpush1.msra.mxu0 0.0
    %1442 = vmatprep.subr.mxu0 0.0
    %1443 = vmatpush1.msra.mxu0 0.0
    %1444 = vmatprep.subr.mxu0 0.0
    %1445 = vmatpush1.msra.mxu0 0.0
    %1446 = vmatprep.subr.mxu0 0.0
    %1447 = vmatpush1.msra.mxu0 0.0
    %1448 = vmatprep.subr.mxu0 0.0
    %1449 = vmatpush1.msra.mxu0 0.0
    %1450 = vmatprep.subr.mxu0 0.0
    %1451 = vmatpush1.msra.mxu0 0.0
    %1452 = vmatprep.subr.mxu0 0.0
    %1453 = vmatpush1.msra.mxu0 0.0
    %1454 = vmatprep.subr.mxu0 0.0
    %1455 = vmatpush1.msra.mxu0 0.0
    %1456 = vmatprep.subr.mxu0 0.0
    %1457 = vmatpush1.msra.mxu0 0.0
    %1458 = vmatprep.subr.mxu0 0.0
    %1459 = vmatpush1.msra.mxu0 0.0
    %1460 = vmatprep.subr.mxu0 0.0
    %1461 = vmatpush1.msra.mxu0 0.0
    %1462 = vmatprep.subr.mxu0 0.0
    %1463 = vmatpush1.msra.mxu0 0.0
    %1464 = vmatprep.subr.mxu0 0.0
    %1465 = vmatpush1.msra.mxu0 0.0
    %1466 = vmatprep.subr.mxu0 0.0
    %1467 = vmatpush1.msra.mxu0 0.0
    %1468 = vmatprep.subr.mxu0 0.0
    %1469 = vmatpush1.msra.mxu0 0.0
    %1470 = vmatprep.subr.mxu0 0.0
    %1471 = vmatpush1.msra.mxu0 0.0
    %1472 = vmatprep.subr.mxu0 0.0
    %1473 = vmatpush1.msra.mxu0 0.0
    %1474 = vmatprep.subr.mxu0 0.0
    %1475 = vmatpush1.msra.mxu0 0.0
    %1476 = vmatprep.subr.mxu0 0.0
    %1477 = vmatpush1.msra.mxu0 0.0
    %1478 = vmatprep.subr.mxu0 0.0
    %1479 = vmatpush1.msra.mxu0 0.0
    %1480 = vmatprep.subr.mxu0 0.0
    %1481 = vmatpush1.msra.mxu0 0.0
    %1482 = vmatprep.subr.mxu0 0.0
    %1483 = vmatpush1.msra.mxu0 0.0
    %1484 = vmatprep.subr.mxu0 0.0
    %1485 = vmatpush1.msra.mxu0 0.0
    %1486 = vmatprep.subr.mxu0 0.0
    %1487 = vmatpush1.msra.mxu0 0.0
    %1488 = vmatprep.subr.mxu0 0.0
    %1489 = vmatpush1.msra.mxu0 0.0
    %1490 = vmatprep.subr.mxu0 0.0
    %1491 = vmatpush1.msra.mxu0 0.0
    %1492 = vmatprep.subr.mxu0 0.0
    %1493 = vmatpush1.msra.mxu0 0.0
    %1494 = vmatprep.subr.mxu0 0.0
    %1495 = vmatpush1.msra.mxu0 0.0
    %1496 = vmatprep.mubr.f32.mxu0 0.0
    %1497 = vmatmul.mubr.f32.gmra.mrb[0].mxu0 %v1332
    %v1498 = vpop.f32.mrb[0].mxu0
    %v1499 = vadd.f32 %v37, %v1498
    %v1500 = vpop.f32.mrb[0].mxu0
    %1501 = vdwg.mxu0
    %1503 = vrot.lane.b32.xlu0 %v1328, 96
    %v1504 = vpop.permute.xlu0 %1503
    %v1505 = vsel %vm139, %v1504, 0
    %1507 = vmatprep.subr.mxu0 0.0
    %1508 = vmatpush1.msra.mxu0 %v29
    %1509 = vmatprep.subr.mxu0 0.0
    %1510 = vmatpush1.msra.mxu0 %v30
    %1511 = vmatprep.subr.mxu0 0.0
    %1512 = vmatpush1.msra.mxu0 %v31
    %1513 = vmatprep.subr.mxu0 0.0
    %1514 = vmatpush1.msra.mxu0 %v32
    %1515 = vmatprep.subr.mxu0 0.0
    %1516 = vmatpush1.msra.mxu0 0.0
    %1517 = vmatprep.subr.mxu0 0.0
    %1518 = vmatpush1.msra.mxu0 0.0
    %1519 = vmatprep.subr.mxu0 0.0
    %1520 = vmatpush1.msra.mxu0 0.0
    %1521 = vmatprep.subr.mxu0 0.0
    %1522 = vmatpush1.msra.mxu0 0.0
    %1523 = vmatprep.subr.mxu0 0.0
    %1524 = vmatpush1.msra.mxu0 0.0
    %1525 = vmatprep.subr.mxu0 0.0
    %1526 = vmatpush1.msra.mxu0 0.0
    %1527 = vmatprep.subr.mxu0 0.0
    %1528 = vmatpush1.msra.mxu0 0.0
    %1529 = vmatprep.subr.mxu0 0.0
    %1530 = vmatpush1.msra.mxu0 0.0
    %1531 = vmatprep.subr.mxu0 0.0
    %1532 = vmatpush1.msra.mxu0 0.0
    %1533 = vmatprep.subr.mxu0 0.0
    %1534 = vmatpush1.msra.mxu0 0.0
    %1535 = vmatprep.subr.mxu0 0.0
    %1536 = vmatpush1.msra.mxu0 0.0
    %1537 = vmatprep.subr.mxu0 0.0
    %1538 = vmatpush1.msra.mxu0 0.0
    %1539 = vmatprep.subr.mxu0 0.0
    %1540 = vmatpush1.msra.mxu0 0.0
    %1541 = vmatprep.subr.mxu0 0.0
    %1542 = vmatpush1.msra.mxu0 0.0
    %1543 = vmatprep.subr.mxu0 0.0
    %1544 = vmatpush1.msra.mxu0 0.0
    %1545 = vmatprep.subr.mxu0 0.0
    %1546 = vmatpush1.msra.mxu0 0.0
    %1547 = vmatprep.subr.mxu0 0.0
    %1548 = vmatpush1.msra.mxu0 0.0
    %1549 = vmatprep.subr.mxu0 0.0
    %1550 = vmatpush1.msra.mxu0 0.0
    %1551 = vmatprep.subr.mxu0 0.0
    %1552 = vmatpush1.msra.mxu0 0.0
    %1553 = vmatprep.subr.mxu0 0.0
    %1554 = vmatpush1.msra.mxu0 0.0
    %1555 = vmatprep.subr.mxu0 0.0
    %1556 = vmatpush1.msra.mxu0 0.0
    %1557 = vmatprep.subr.mxu0 0.0
    %1558 = vmatpush1.msra.mxu0 0.0
    %1559 = vmatprep.subr.mxu0 0.0
    %1560 = vmatpush1.msra.mxu0 0.0
    %1561 = vmatprep.subr.mxu0 0.0
    %1562 = vmatpush1.msra.mxu0 0.0
    %1563 = vmatprep.subr.mxu0 0.0
    %1564 = vmatpush1.msra.mxu0 0.0
    %1565 = vmatprep.subr.mxu0 0.0
    %1566 = vmatpush1.msra.mxu0 0.0
    %1567 = vmatprep.subr.mxu0 0.0
    %1568 = vmatpush1.msra.mxu0 0.0
    %1569 = vmatprep.subr.mxu0 0.0
    %1570 = vmatpush1.msra.mxu0 0.0
    %1571 = vmatprep.mubr.f32.mxu0 0.0
    %1572 = vmatmul.mubr.f32.gmra.mrb[0].mxu0 %v1505
    %v1573 = vpop.f32.mrb[0].mxu0
    %v1574 = vadd.f32 %v42, %v1573
    %v1575 = vpop.f32.mrb[0].mxu0
    %1576 = vdwg.mxu0
    %v1577 = vadd.f32 %v1499, %v1574
    %v1578 = vmul.f32 %v1577, 0.5
    %v1579 = vtanh.pop %v1578
    %v1580 = vmul.f32 %v1579, 0.5
    %v1581 = vadd.f32 %v1580, 0.5
    %1583 = vrot.lane.b32.xlu0 %v1574, 64
    %v1584 = vpop.permute.xlu0 %1583
    %v1586 = vmul.f32 %v1581, %v1584
    %1588 = vrot.lane.b32.xlu0 %v1586, 64
    %v1589 = vpop.permute.xlu0 %1588
    %v1591 = vadd.f32 %v1499, %v1589
    %v1592 = vtanh.pop %v1591
    %v1593 = vsub.f32 1.0, %v1581
    %1595 = vrot.lane.b32.xlu0 %v1592, 96
    %v1596 = vpop.permute.xlu0 %1595
    %v1598 = vmul.f32 %v1593, %v1596
    %v1599 = vmul.f32 %v1581, %v1328
    %v1600 = vadd.f32 %v1598, %v1599
    %v1602 = vrot.slane %v1431, 2
    %1603 = vrot.lane.b32.xlu0 %v1602, 96
    %v1604 = vpop.permute.xlu0 %1603
    %v1605 = vsel %vm139, %v1604, 0
    %1607 = vmatprep.subr.mxu0 0.0
    %1608 = vmatpush1.msra.mxu0 %v16
    %1609 = vmatprep.subr.mxu0 0.0
    %1610 = vmatpush1.msra.mxu0 %v17
    %1611 = vmatprep.subr.mxu0 0.0
    %1612 = vmatpush1.msra.mxu0 %v18
    %1613 = vmatprep.subr.mxu0 0.0
    %1614 = vmatpush1.msra.mxu0 %v19
    %1615 = vmatprep.subr.mxu0 0.0
    %1616 = vmatpush1.msra.mxu0 0.0
    %1617 = vmatprep.subr.mxu0 0.0
    %1618 = vmatpush1.msra.mxu0 0.0
    %1619 = vmatprep.subr.mxu0 0.0
    %1620 = vmatpush1.msra.mxu0 0.0
    %1621 = vmatprep.subr.mxu0 0.0
    %1622 = vmatpush1.msra.mxu0 0.0
    %1623 = vmatprep.subr.mxu0 0.0
    %1624 = vmatpush1.msra.mxu0 0.0
    %1625 = vmatprep.subr.mxu0 0.0
    %1626 = vmatpush1.msra.mxu0 0.0
    %1627 = vmatprep.subr.mxu0 0.0
    %1628 = vmatpush1.msra.mxu0 0.0
    %1629 = vmatprep.subr.mxu0 0.0
    %1630 = vmatpush1.msra.mxu0 0.0
    %1631 = vmatprep.subr.mxu0 0.0
    %1632 = vmatpush1.msra.mxu0 0.0
    %1633 = vmatprep.subr.mxu0 0.0
    %1634 = vmatpush1.msra.mxu0 0.0
    %1635 = vmatprep.subr.mxu0 0.0
    %1636 = vmatpush1.msra.mxu0 0.0
    %1637 = vmatprep.subr.mxu0 0.0
    %1638 = vmatpush1.msra.mxu0 0.0
    %1639 = vmatprep.subr.mxu0 0.0
    %1640 = vmatpush1.msra.mxu0 0.0
    %1641 = vmatprep.subr.mxu0 0.0
    %1642 = vmatpush1.msra.mxu0 0.0
    %1643 = vmatprep.subr.mxu0 0.0
    %1644 = vmatpush1.msra.mxu0 0.0
    %1645 = vmatprep.subr.mxu0 0.0
    %1646 = vmatpush1.msra.mxu0 0.0
    %1647 = vmatprep.subr.mxu0 0.0
    %1648 = vmatpush1.msra.mxu0 0.0
    %1649 = vmatprep.subr.mxu0 0.0
    %1650 = vmatpush1.msra.mxu0 0.0
    %1651 = vmatprep.subr.mxu0 0.0
    %1652 = vmatpush1.msra.mxu0 0.0
    %1653 = vmatprep.subr.mxu0 0.0
    %1654 = vmatpush1.msra.mxu0 0.0
    %1655 = vmatprep.subr.mxu0 0.0
    %1656 = vmatpush1.msra.mxu0 0.0
    %1657 = vmatprep.subr.mxu0 0.0
    %1658 = vmatpush1.msra.mxu0 0.0
    %1659 = vmatprep.subr.mxu0 0.0
    %1660 = vmatpush1.msra.mxu0 0.0
    %1661 = vmatprep.subr.mxu0 0.0
    %1662 = vmatpush1.msra.mxu0 0.0
    %1663 = vmatprep.subr.mxu0 0.0
    %1664 = vmatpush1.msra.mxu0 0.0
    %1665 = vmatprep.subr.mxu0 0.0
    %1666 = vmatpush1.msra.mxu0 0.0
    %1667 = vmatprep.subr.mxu0 0.0
    %1668 = vmatpush1.msra.mxu0 0.0
    %1669 = vmatprep.subr.mxu0 0.0
    %1670 = vmatpush1.msra.mxu0 0.0
    %1671 = vmatprep.mubr.f32.mxu0 0.0
    %1672 = vmatmul.mubr.f32.gmra.mrb[0].mxu0 %v1605
    %v1673 = vpop.f32.mrb[0].mxu0
    %v1674 = vadd.f32 %v24, %v1673
    %v1675 = vpop.f32.mrb[0].mxu0
    %1676 = vdwg.mxu0
    %v1678 = vrot.slane %v1674, 4
    %v1680 = vadd.f32 %v133, %v1678
    %v1681 = vmul.f32 %v1680, 0.5
    %v1682 = vtanh.pop %v1681
    %v1683 = vmul.f32 %v1682, 0.5
    %v1684 = vadd.f32 %v1683, 0.5
    %1685 = vrot.lane.b32.xlu0 %v1678, 64
    %v1686 = vpop.permute.xlu0 %1685
    %v1688 = vmul.f32 %v1684, %v1686
    %1690 = vrot.lane.b32.xlu0 %v1688, 64
    %v1691 = vpop.permute.xlu0 %1690
    %v1693 = vadd.f32 %v133, %v1691
    %v1694 = vtanh.pop %v1693
    %v1695 = vsub.f32 1.0, %v1684
    %1697 = vrot.lane.b32.xlu0 %v1694, 96
    %v1698 = vpop.permute.xlu0 %1697
    %v1700 = vmul.f32 %v1695, %v1698
    %v1701 = vrot.slane %v1431, 6
    %v1703 = vmul.f32 %v1684, %v1701
    %v1704 = vadd.f32 %v1700, %v1703
    %1705 = vmatprep.subr.mxu0 0.0
    %1706 = vmatpush1.msra.mxu0 %v25
    %1707 = vmatprep.subr.mxu0 0.0
    %1708 = vmatpush1.msra.mxu0 %v26
    %1709 = vmatprep.subr.mxu0 0.0
    %1710 = vmatpush1.msra.mxu0 %v27
    %1711 = vmatprep.subr.mxu0 0.0
    %1712 = vmatpush1.msra.mxu0 %v28
    %1713 = vmatprep.subr.mxu0 0.0
    %1714 = vmatpush1.msra.mxu0 0.0
    %1715 = vmatprep.subr.mxu0 0.0
    %1716 = vmatpush1.msra.mxu0 0.0
    %1717 = vmatprep.subr.mxu0 0.0
    %1718 = vmatpush1.msra.mxu0 0.0
    %1719 = vmatprep.subr.mxu0 0.0
    %1720 = vmatpush1.msra.mxu0 0.0
    %1721 = vmatprep.subr.mxu0 0.0
    %1722 = vmatpush1.msra.mxu0 0.0
    %1723 = vmatprep.subr.mxu0 0.0
    %1724 = vmatpush1.msra.mxu0 0.0
    %1725 = vmatprep.subr.mxu0 0.0
    %1726 = vmatpush1.msra.mxu0 0.0
    %1727 = vmatprep.subr.mxu0 0.0
    %1728 = vmatpush1.msra.mxu0 0.0
    %1729 = vmatprep.subr.mxu0 0.0
    %1730 = vmatpush1.msra.mxu0 0.0
    %1731 = vmatprep.subr.mxu0 0.0
    %1732 = vmatpush1.msra.mxu0 0.0
    %1733 = vmatprep.subr.mxu0 0.0
    %1734 = vmatpush1.msra.mxu0 0.0
    %1735 = vmatprep.subr.mxu0 0.0
    %1736 = vmatpush1.msra.mxu0 0.0
    %1737 = vmatprep.subr.mxu0 0.0
    %1738 = vmatpush1.msra.mxu0 0.0
    %1739 = vmatprep.subr.mxu0 0.0
    %1740 = vmatpush1.msra.mxu0 0.0
    %1741 = vmatprep.subr.mxu0 0.0
    %1742 = vmatpush1.msra.mxu0 0.0
    %1743 = vmatprep.subr.mxu0 0.0
    %1744 = vmatpush1.msra.mxu0 0.0
    %1745 = vmatprep.subr.mxu0 0.0
    %1746 = vmatpush1.msra.mxu0 0.0
    %1747 = vmatprep.subr.mxu0 0.0
    %1748 = vmatpush1.msra.mxu0 0.0
    %1749 = vmatprep.subr.mxu0 0.0
    %1750 = vmatpush1.msra.mxu0 0.0
    %1751 = vmatprep.subr.mxu0 0.0
    %1752 = vmatpush1.msra.mxu0 0.0
    %1753 = vmatprep.subr.mxu0 0.0
    %1754 = vmatpush1.msra.mxu0 0.0
    %1755 = vmatprep.subr.mxu0 0.0
    %1756 = vmatpush1.msra.mxu0 0.0
    %1757 = vmatprep.subr.mxu0 0.0
    %1758 = vmatpush1.msra.mxu0 0.0
    %1759 = vmatprep.subr.mxu0 0.0
    %1760 = vmatpush1.msra.mxu0 0.0
    %1761 = vmatprep.subr.mxu0 0.0
    %1762 = vmatpush1.msra.mxu0 0.0
    %1763 = vmatprep.subr.mxu0 0.0
    %1764 = vmatpush1.msra.mxu0 0.0
    %1765 = vmatprep.subr.mxu0 0.0
    %1766 = vmatpush1.msra.mxu0 0.0
    %1767 = vmatprep.subr.mxu0 0.0
    %1768 = vmatpush1.msra.mxu0 0.0
    %1769 = vmatprep.mubr.f32.mxu0 0.0
    %1770 = vmatmul.mubr.f32.gmra.mrb[0].mxu0 %v1605
    %v1771 = vpop.f32.mrb[0].mxu0
    %v1772 = vadd.f32 %v37, %v1771
    %v1773 = vpop.f32.mrb[0].mxu0
    %1774 = vdwg.mxu0
    %1776 = vrot.lane.b32.xlu0 %v1600, 96
    %v1777 = vpop.permute.xlu0 %1776
    %v1778 = vsel %vm139, %v1777, 0
    %1780 = vmatprep.subr.mxu0 0.0
    %1781 = vmatpush1.msra.mxu0 %v29
    %1782 = vmatprep.subr.mxu0 0.0
    %1783 = vmatpush1.msra.mxu0 %v30
    %1784 = vmatprep.subr.mxu0 0.0
    %1785 = vmatpush1.msra.mxu0 %v31
    %1786 = vmatprep.subr.mxu0 0.0
    %1787 = vmatpush1.msra.mxu0 %v32
    %1788 = vmatprep.subr.mxu0 0.0
    %1789 = vmatpush1.msra.mxu0 0.0
    %1790 = vmatprep.subr.mxu0 0.0
    %1791 = vmatpush1.msra.mxu0 0.0
    %1792 = vmatprep.subr.mxu0 0.0
    %1793 = vmatpush1.msra.mxu0 0.0
    %1794 = vmatprep.subr.mxu0 0.0
    %1795 = vmatpush1.msra.mxu0 0.0
    %1796 = vmatprep.subr.mxu0 0.0
    %1797 = vmatpush1.msra.mxu0 0.0
    %1798 = vmatprep.subr.mxu0 0.0
    %1799 = vmatpush1.msra.mxu0 0.0
    %1800 = vmatprep.subr.mxu0 0.0
    %1801 = vmatpush1.msra.mxu0 0.0
    %1802 = vmatprep.subr.mxu0 0.0
    %1803 = vmatpush1.msra.mxu0 0.0
    %1804 = vmatprep.subr.mxu0 0.0
    %1805 = vmatpush1.msra.mxu0 0.0
    %1806 = vmatprep.subr.mxu0 0.0
    %1807 = vmatpush1.msra.mxu0 0.0
    %1808 = vmatprep.subr.mxu0 0.0
    %1809 = vmatpush1.msra.mxu0 0.0
    %1810 = vmatprep.subr.mxu0 0.0
    %1811 = vmatpush1.msra.mxu0 0.0
    %1812 = vmatprep.subr.mxu0 0.0
    %1813 = vmatpush1.msra.mxu0 0.0
    %1814 = vmatprep.subr.mxu0 0.0
    %1815 = vmatpush1.msra.mxu0 0.0
    %1816 = vmatprep.subr.mxu0 0.0
    %1817 = vmatpush1.msra.mxu0 0.0
    %1818 = vmatprep.subr.mxu0 0.0
    %1819 = vmatpush1.msra.mxu0 0.0
    %1820 = vmatprep.subr.mxu0 0.0
    %1821 = vmatpush1.msra.mxu0 0.0
    %1822 = vmatprep.subr.mxu0 0.0
    %1823 = vmatpush1.msra.mxu0 0.0
    %1824 = vmatprep.subr.mxu0 0.0
    %1825 = vmatpush1.msra.mxu0 0.0
    %1826 = vmatprep.subr.mxu0 0.0
    %1827 = vmatpush1.msra.mxu0 0.0
    %1828 = vmatprep.subr.mxu0 0.0
    %1829 = vmatpush1.msra.mxu0 0.0
    %1830 = vmatprep.subr.mxu0 0.0
    %1831 = vmatpush1.msra.mxu0 0.0
    %1832 = vmatprep.subr.mxu0 0.0
    %1833 = vmatpush1.msra.mxu0 0.0
    %1834 = vmatprep.subr.mxu0 0.0
    %1835 = vmatpush1.msra.mxu0 0.0
    %1836 = vmatprep.subr.mxu0 0.0
    %1837 = vmatpush1.msra.mxu0 0.0
    %1838 = vmatprep.subr.mxu0 0.0
    %1839 = vmatpush1.msra.mxu0 0.0
    %1840 = vmatprep.subr.mxu0 0.0
    %1841 = vmatpush1.msra.mxu0 0.0
    %1842 = vmatprep.subr.mxu0 0.0
    %1843 = vmatpush1.msra.mxu0 0.0
    %1844 = vmatprep.mubr.f32.mxu0 0.0
    %1845 = vmatmul.mubr.f32.gmra.mrb[0].mxu0 %v1778
    %v1846 = vpop.f32.mrb[0].mxu0
    %v1847 = vadd.f32 %v42, %v1846
    %v1848 = vpop.f32.mrb[0].mxu0
    %1849 = vdwg.mxu0
    %v1850 = vadd.f32 %v1772, %v1847
    %v1851 = vmul.f32 %v1850, 0.5
    %v1852 = vtanh.pop %v1851
    %v1853 = vmul.f32 %v1852, 0.5
    %v1854 = vadd.f32 %v1853, 0.5
    %1856 = vrot.lane.b32.xlu0 %v1847, 64
    %v1857 = vpop.permute.xlu0 %1856
    %v1859 = vmul.f32 %v1854, %v1857
    %1861 = vrot.lane.b32.xlu0 %v1859, 64
    %v1862 = vpop.permute.xlu0 %1861
    %v1864 = vadd.f32 %v1772, %v1862
    %v1865 = vtanh.pop %v1864
    %v1866 = vsub.f32 1.0, %v1854
    %1868 = vrot.lane.b32.xlu0 %v1865, 96
    %v1869 = vpop.permute.xlu0 %1868
    %v1871 = vmul.f32 %v1866, %v1869
    %v1872 = vmul.f32 %v1854, %v1600
    %v1873 = vadd.f32 %v1871, %v1872
    %v1875 = vrot.slane %v1704, 4
    %1876 = vrot.lane.b32.xlu0 %v1875, 96
    %v1877 = vpop.permute.xlu0 %1876
    %v1878 = vsel %vm139, %v1877, 0
    %1880 = vmatprep.subr.mxu0 0.0
    %1881 = vmatpush1.msra.mxu0 %v16
    %1882 = vmatprep.subr.mxu0 0.0
    %1883 = vmatpush1.msra.mxu0 %v17
    %1884 = vmatprep.subr.mxu0 0.0
    %1885 = vmatpush1.msra.mxu0 %v18
    %1886 = vmatprep.subr.mxu0 0.0
    %1887 = vmatpush1.msra.mxu0 %v19
    %1888 = vmatprep.subr.mxu0 0.0
    %1889 = vmatpush1.msra.mxu0 0.0
    %1890 = vmatprep.subr.mxu0 0.0
    %1891 = vmatpush1.msra.mxu0 0.0
    %1892 = vmatprep.subr.mxu0 0.0
    %1893 = vmatpush1.msra.mxu0 0.0
    %1894 = vmatprep.subr.mxu0 0.0
    %1895 = vmatpush1.msra.mxu0 0.0
    %1896 = vmatprep.subr.mxu0 0.0
    %1897 = vmatpush1.msra.mxu0 0.0
    %1898 = vmatprep.subr.mxu0 0.0
    %1899 = vmatpush1.msra.mxu0 0.0
    %1900 = vmatprep.subr.mxu0 0.0
    %1901 = vmatpush1.msra.mxu0 0.0
    %1902 = vmatprep.subr.mxu0 0.0
    %1903 = vmatpush1.msra.mxu0 0.0
    %1904 = vmatprep.subr.mxu0 0.0
    %1905 = vmatpush1.msra.mxu0 0.0
    %1906 = vmatprep.subr.mxu0 0.0
    %1907 = vmatpush1.msra.mxu0 0.0
    %1908 = vmatprep.subr.mxu0 0.0
    %1909 = vmatpush1.msra.mxu0 0.0
    %1910 = vmatprep.subr.mxu0 0.0
    %1911 = vmatpush1.msra.mxu0 0.0
    %1912 = vmatprep.subr.mxu0 0.0
    %1913 = vmatpush1.msra.mxu0 0.0
    %1914 = vmatprep.subr.mxu0 0.0
    %1915 = vmatpush1.msra.mxu0 0.0
    %1916 = vmatprep.subr.mxu0 0.0
    %1917 = vmatpush1.msra.mxu0 0.0
    %1918 = vmatprep.subr.mxu0 0.0
    %1919 = vmatpush1.msra.mxu0 0.0
    %1920 = vmatprep.subr.mxu0 0.0
    %1921 = vmatpush1.msra.mxu0 0.0
    %1922 = vmatprep.subr.mxu0 0.0
    %1923 = vmatpush1.msra.mxu0 0.0
    %1924 = vmatprep.subr.mxu0 0.0
    %1925 = vmatpush1.msra.mxu0 0.0
    %1926 = vmatprep.subr.mxu0 0.0
    %1927 = vmatpush1.msra.mxu0 0.0
    %1928 = vmatprep.subr.mxu0 0.0
    %1929 = vmatpush1.msra.mxu0 0.0
    %1930 = vmatprep.subr.mxu0 0.0
    %1931 = vmatpush1.msra.mxu0 0.0
    %1932 = vmatprep.subr.mxu0 0.0
    %1933 = vmatpush1.msra.mxu0 0.0
    %1934 = vmatprep.subr.mxu0 0.0
    %1935 = vmatpush1.msra.mxu0 0.0
    %1936 = vmatprep.subr.mxu0 0.0
    %1937 = vmatpush1.msra.mxu0 0.0
    %1938 = vmatprep.subr.mxu0 0.0
    %1939 = vmatpush1.msra.mxu0 0.0
    %1940 = vmatprep.subr.mxu0 0.0
    %1941 = vmatpush1.msra.mxu0 0.0
    %1942 = vmatprep.subr.mxu0 0.0
    %1943 = vmatpush1.msra.mxu0 0.0
    %1944 = vmatprep.mubr.f32.mxu0 0.0
    %1945 = vmatmul.mubr.f32.gmra.mrb[0].mxu0 %v1878
    %v1946 = vpop.f32.mrb[0].mxu0
    %v1947 = vadd.f32 %v24, %v1946
    %v1948 = vpop.f32.mrb[0].mxu0
    %1949 = vdwg.mxu0
    %v1951 = vrot.slane %v1947, 2
    %v1953 = vadd.f32 %v133, %v1951
    %v1954 = vmul.f32 %v1953, 0.5
    %v1955 = vtanh.pop %v1954
    %v1956 = vmul.f32 %v1955, 0.5
    %v1957 = vadd.f32 %v1956, 0.5
    %1958 = vrot.lane.b32.xlu0 %v1951, 64
    %v1959 = vpop.permute.xlu0 %1958
    %v1961 = vmul.f32 %v1957, %v1959
    %1963 = vrot.lane.b32.xlu0 %v1961, 64
    %v1964 = vpop.permute.xlu0 %1963
    %v1966 = vadd.f32 %v133, %v1964
    %v1967 = vtanh.pop %v1966
    %v1968 = vsub.f32 1.0, %v1957
    %1970 = vrot.lane.b32.xlu0 %v1967, 96
    %v1971 = vpop.permute.xlu0 %1970
    %v1973 = vmul.f32 %v1968, %v1971
    %v1974 = vrot.slane %v1704, 6
    %v1976 = vmul.f32 %v1957, %v1974
    %v1977 = vadd.f32 %v1973, %v1976
    %1978 = vmatprep.subr.mxu0 0.0
    %1979 = vmatpush1.msra.mxu0 %v25
    %1980 = vmatprep.subr.mxu0 0.0
    %1981 = vmatpush1.msra.mxu0 %v26
    %1982 = vmatprep.subr.mxu0 0.0
    %1983 = vmatpush1.msra.mxu0 %v27
    %1984 = vmatprep.subr.mxu0 0.0
    %1985 = vmatpush1.msra.mxu0 %v28
    %1986 = vmatprep.subr.mxu0 0.0
    %1987 = vmatpush1.msra.mxu0 0.0
    %1988 = vmatprep.subr.mxu0 0.0
    %1989 = vmatpush1.msra.mxu0 0.0
    %1990 = vmatprep.subr.mxu0 0.0
    %1991 = vmatpush1.msra.mxu0 0.0
    %1992 = vmatprep.subr.mxu0 0.0
    %1993 = vmatpush1.msra.mxu0 0.0
    %1994 = vmatprep.subr.mxu0 0.0
    %1995 = vmatpush1.msra.mxu0 0.0
    %1996 = vmatprep.subr.mxu0 0.0
    %1997 = vmatpush1.msra.mxu0 0.0
    %1998 = vmatprep.subr.mxu0 0.0
    %1999 = vmatpush1.msra.mxu0 0.0
    %2000 = vmatprep.subr.mxu0 0.0
    %2001 = vmatpush1.msra.mxu0 0.0
    %2002 = vmatprep.subr.mxu0 0.0
    %2003 = vmatpush1.msra.mxu0 0.0
    %2004 = vmatprep.subr.mxu0 0.0
    %2005 = vmatpush1.msra.mxu0 0.0
    %2006 = vmatprep.subr.mxu0 0.0
    %2007 = vmatpush1.msra.mxu0 0.0
    %2008 = vmatprep.subr.mxu0 0.0
    %2009 = vmatpush1.msra.mxu0 0.0
    %2010 = vmatprep.subr.mxu0 0.0
    %2011 = vmatpush1.msra.mxu0 0.0
    %2012 = vmatprep.subr.mxu0 0.0
    %2013 = vmatpush1.msra.mxu0 0.0
    %2014 = vmatprep.subr.mxu0 0.0
    %2015 = vmatpush1.msra.mxu0 0.0
    %2016 = vmatprep.subr.mxu0 0.0
    %2017 = vmatpush1.msra.mxu0 0.0
    %2018 = vmatprep.subr.mxu0 0.0
    %2019 = vmatpush1.msra.mxu0 0.0
    %2020 = vmatprep.subr.mxu0 0.0
    %2021 = vmatpush1.msra.mxu0 0.0
    %2022 = vmatprep.subr.mxu0 0.0
    %2023 = vmatpush1.msra.mxu0 0.0
    %2024 = vmatprep.subr.mxu0 0.0
    %2025 = vmatpush1.msra.mxu0 0.0
    %2026 = vmatprep.subr.mxu0 0.0
    %2027 = vmatpush1.msra.mxu0 0.0
    %2028 = vmatprep.subr.mxu0 0.0
    %2029 = vmatpush1.msra.mxu0 0.0
    %2030 = vmatprep.subr.mxu0 0.0
    %2031 = vmatpush1.msra.mxu0 0.0
    %2032 = vmatprep.subr.mxu0 0.0
    %2033 = vmatpush1.msra.mxu0 0.0
    %2034 = vmatprep.subr.mxu0 0.0
    %2035 = vmatpush1.msra.mxu0 0.0
    %2036 = vmatprep.subr.mxu0 0.0
    %2037 = vmatpush1.msra.mxu0 0.0
    %2038 = vmatprep.subr.mxu0 0.0
    %2039 = vmatpush1.msra.mxu0 0.0
    %2040 = vmatprep.subr.mxu0 0.0
    %2041 = vmatpush1.msra.mxu0 0.0
    %2042 = vmatprep.mubr.f32.mxu0 0.0
    %2043 = vmatmul.mubr.f32.gmra.mrb[0].mxu0 %v1878
    %v2044 = vpop.f32.mrb[0].mxu0
    %v2045 = vadd.f32 %v37, %v2044
    %v2046 = vpop.f32.mrb[0].mxu0
    %2047 = vdwg.mxu0
    %2049 = vrot.lane.b32.xlu0 %v1873, 96
    %v2050 = vpop.permute.xlu0 %2049
    %v2051 = vsel %vm139, %v2050, 0
    %2053 = vmatprep.subr.mxu0 0.0
    %2054 = vmatpush1.msra.mxu0 %v29
    %2055 = vmatprep.subr.mxu0 0.0
    %2056 = vmatpush1.msra.mxu0 %v30
    %2057 = vmatprep.subr.mxu0 0.0
    %2058 = vmatpush1.msra.mxu0 %v31
    %2059 = vmatprep.subr.mxu0 0.0
    %2060 = vmatpush1.msra.mxu0 %v32
    %2061 = vmatprep.subr.mxu0 0.0
    %2062 = vmatpush1.msra.mxu0 0.0
    %2063 = vmatprep.subr.mxu0 0.0
    %2064 = vmatpush1.msra.mxu0 0.0
    %2065 = vmatprep.subr.mxu0 0.0
    %2066 = vmatpush1.msra.mxu0 0.0
    %2067 = vmatprep.subr.mxu0 0.0
    %2068 = vmatpush1.msra.mxu0 0.0
    %2069 = vmatprep.subr.mxu0 0.0
    %2070 = vmatpush1.msra.mxu0 0.0
    %2071 = vmatprep.subr.mxu0 0.0
    %2072 = vmatpush1.msra.mxu0 0.0
    %2073 = vmatprep.subr.mxu0 0.0
    %2074 = vmatpush1.msra.mxu0 0.0
    %2075 = vmatprep.subr.mxu0 0.0
    %2076 = vmatpush1.msra.mxu0 0.0
    %2077 = vmatprep.subr.mxu0 0.0
    %2078 = vmatpush1.msra.mxu0 0.0
    %2079 = vmatprep.subr.mxu0 0.0
    %2080 = vmatpush1.msra.mxu0 0.0
    %2081 = vmatprep.subr.mxu0 0.0
    %2082 = vmatpush1.msra.mxu0 0.0
    %2083 = vmatprep.subr.mxu0 0.0
    %2084 = vmatpush1.msra.mxu0 0.0
    %2085 = vmatprep.subr.mxu0 0.0
    %2086 = vmatpush1.msra.mxu0 0.0
    %2087 = vmatprep.subr.mxu0 0.0
    %2088 = vmatpush1.msra.mxu0 0.0
    %2089 = vmatprep.subr.mxu0 0.0
    %2090 = vmatpush1.msra.mxu0 0.0
    %2091 = vmatprep.subr.mxu0 0.0
    %2092 = vmatpush1.msra.mxu0 0.0
    %2093 = vmatprep.subr.mxu0 0.0
    %2094 = vmatpush1.msra.mxu0 0.0
    %2095 = vmatprep.subr.mxu0 0.0
    %2096 = vmatpush1.msra.mxu0 0.0
    %2097 = vmatprep.subr.mxu0 0.0
    %2098 = vmatpush1.msra.mxu0 0.0
    %2099 = vmatprep.subr.mxu0 0.0
    %2100 = vmatpush1.msra.mxu0 0.0
    %2101 = vmatprep.subr.mxu0 0.0
    %2102 = vmatpush1.msra.mxu0 0.0
    %2103 = vmatprep.subr.mxu0 0.0
    %2104 = vmatpush1.msra.mxu0 0.0
    %2105 = vmatprep.subr.mxu0 0.0
    %2106 = vmatpush1.msra.mxu0 0.0
    %2107 = vmatprep.subr.mxu0 0.0
    %2108 = vmatpush1.msra.mxu0 0.0
    %2109 = vmatprep.subr.mxu0 0.0
    %2110 = vmatpush1.msra.mxu0 0.0
    %2111 = vmatprep.subr.mxu0 0.0
    %2112 = vmatpush1.msra.mxu0 0.0
    %2113 = vmatprep.subr.mxu0 0.0
    %2114 = vmatpush1.msra.mxu0 0.0
    %2115 = vmatprep.subr.mxu0 0.0
    %2116 = vmatpush1.msra.mxu0 0.0
    %2117 = vmatprep.mubr.f32.mxu0 0.0
    %2118 = vmatmul.mubr.f32.gmra.mrb[0].mxu0 %v2051
    %v2119 = vpop.f32.mrb[0].mxu0
    %v2120 = vadd.f32 %v42, %v2119
    %v2121 = vpop.f32.mrb[0].mxu0
    %2122 = vdwg.mxu0
    %v2123 = vadd.f32 %v2045, %v2120
    %v2124 = vmul.f32 %v2123, 0.5
    %v2125 = vtanh.pop %v2124
    %v2126 = vmul.f32 %v2125, 0.5
    %v2127 = vadd.f32 %v2126, 0.5
    %2129 = vrot.lane.b32.xlu0 %v2120, 64
    %v2130 = vpop.permute.xlu0 %2129
    %v2132 = vmul.f32 %v2127, %v2130
    %2134 = vrot.lane.b32.xlu0 %v2132, 64
    %v2135 = vpop.permute.xlu0 %2134
    %v2137 = vadd.f32 %v2045, %v2135
    %v2138 = vtanh.pop %v2137
    %v2139 = vsub.f32 1.0, %v2127
    %2141 = vrot.lane.b32.xlu0 %v2138, 96
    %v2142 = vpop.permute.xlu0 %2141
    %v2144 = vmul.f32 %v2139, %v2142
    %v2145 = vmul.f32 %v2127, %v1873
    %v2146 = vadd.f32 %v2144, %v2145
    %v2148 = vrot.slane %v1977, 6
    %2149 = vrot.lane.b32.xlu0 %v2148, 96
    %v2150 = vpop.permute.xlu0 %2149
    %v2151 = vsel %vm139, %v2150, 0
    %2153 = vmatprep.subr.mxu0 0.0
    %2154 = vmatpush1.msra.mxu0 %v25
    %2155 = vmatprep.subr.mxu0 0.0
    %2156 = vmatpush1.msra.mxu0 %v26
    %2157 = vmatprep.subr.mxu0 0.0
    %2158 = vmatpush1.msra.mxu0 %v27
    %2159 = vmatprep.subr.mxu0 0.0
    %2160 = vmatpush1.msra.mxu0 %v28
    %2161 = vmatprep.subr.mxu0 0.0
    %2162 = vmatpush1.msra.mxu0 0.0
    %2163 = vmatprep.subr.mxu0 0.0
    %2164 = vmatpush1.msra.mxu0 0.0
    %2165 = vmatprep.subr.mxu0 0.0
    %2166 = vmatpush1.msra.mxu0 0.0
    %2167 = vmatprep.subr.mxu0 0.0
    %2168 = vmatpush1.msra.mxu0 0.0
    %2169 = vmatprep.subr.mxu0 0.0
    %2170 = vmatpush1.msra.mxu0 0.0
    %2171 = vmatprep.subr.mxu0 0.0
    %2172 = vmatpush1.msra.mxu0 0.0
    %2173 = vmatprep.subr.mxu0 0.0
    %2174 = vmatpush1.msra.mxu0 0.0
    %2175 = vmatprep.subr.mxu0 0.0
    %2176 = vmatpush1.msra.mxu0 0.0
    %2177 = vmatprep.subr.mxu0 0.0
    %2178 = vmatpush1.msra.mxu0 0.0
    %2179 = vmatprep.subr.mxu0 0.0
    %2180 = vmatpush1.msra.mxu0 0.0
    %2181 = vmatprep.subr.mxu0 0.0
    %2182 = vmatpush1.msra.mxu0 0.0
    %2183 = vmatprep.subr.mxu0 0.0
    %2184 = vmatpush1.msra.mxu0 0.0
    %2185 = vmatprep.subr.mxu0 0.0
    %2186 = vmatpush1.msra.mxu0 0.0
    %2187 = vmatprep.subr.mxu0 0.0
    %2188 = vmatpush1.msra.mxu0 0.0
    %2189 = vmatprep.subr.mxu0 0.0
    %2190 = vmatpush1.msra.mxu0 0.0
    %2191 = vmatprep.subr.mxu0 0.0
    %2192 = vmatpush1.msra.mxu0 0.0
    %2193 = vmatprep.subr.mxu0 0.0
    %2194 = vmatpush1.msra.mxu0 0.0
    %2195 = vmatprep.subr.mxu0 0.0
    %2196 = vmatpush1.msra.mxu0 0.0
    %2197 = vmatprep.subr.mxu0 0.0
    %2198 = vmatpush1.msra.mxu0 0.0
    %2199 = vmatprep.subr.mxu0 0.0
    %2200 = vmatpush1.msra.mxu0 0.0
    %2201 = vmatprep.subr.mxu0 0.0
    %2202 = vmatpush1.msra.mxu0 0.0
    %2203 = vmatprep.subr.mxu0 0.0
    %2204 = vmatpush1.msra.mxu0 0.0
    %2205 = vmatprep.subr.mxu0 0.0
    %2206 = vmatpush1.msra.mxu0 0.0
    %2207 = vmatprep.subr.mxu0 0.0
    %2208 = vmatpush1.msra.mxu0 0.0
    %2209 = vmatprep.subr.mxu0 0.0
    %2210 = vmatpush1.msra.mxu0 0.0
    %2211 = vmatprep.subr.mxu0 0.0
    %2212 = vmatpush1.msra.mxu0 0.0
    %2213 = vmatprep.subr.mxu0 0.0
    %2214 = vmatpush1.msra.mxu0 0.0
    %2215 = vmatprep.subr.mxu0 0.0
    %2216 = vmatpush1.msra.mxu0 0.0
    %2217 = vmatprep.mubr.f32.mxu0 0.0
    %2218 = vmatmul.mubr.f32.gmra.mrb[0].mxu0 %v2151
    %v2219 = vpop.f32.mrb[0].mxu0
    %v2220 = vadd.f32 %v37, %v2219
    %v2221 = vpop.f32.mrb[0].mxu0
    %2222 = vdwg.mxu0
    %2224 = vrot.lane.b32.xlu0 %v2146, 96
    %v2225 = vpop.permute.xlu0 %2224
    %v2226 = vsel %vm139, %v2225, 0
    %2228 = vmatprep.subr.mxu0 0.0
    %2229 = vmatpush1.msra.mxu0 %v29
    %2230 = vmatprep.subr.mxu0 0.0
    %2231 = vmatpush1.msra.mxu0 %v30
    %2232 = vmatprep.subr.mxu0 0.0
    %2233 = vmatpush1.msra.mxu0 %v31
    %2234 = vmatprep.subr.mxu0 0.0
    %2235 = vmatpush1.msra.mxu0 %v32
    %2236 = vmatprep.subr.mxu0 0.0
    %2237 = vmatpush1.msra.mxu0 0.0
    %2238 = vmatprep.subr.mxu0 0.0
    %2239 = vmatpush1.msra.mxu0 0.0
    %2240 = vmatprep.subr.mxu0 0.0
    %2241 = vmatpush1.msra.mxu0 0.0
    %2242 = vmatprep.subr.mxu0 0.0
    %2243 = vmatpush1.msra.mxu0 0.0
    %2244 = vmatprep.subr.mxu0 0.0
    %2245 = vmatpush1.msra.mxu0 0.0
    %2246 = vmatprep.subr.mxu0 0.0
    %2247 = vmatpush1.msra.mxu0 0.0
    %2248 = vmatprep.subr.mxu0 0.0
    %2249 = vmatpush1.msra.mxu0 0.0
    %2250 = vmatprep.subr.mxu0 0.0
    %2251 = vmatpush1.msra.mxu0 0.0
    %2252 = vmatprep.subr.mxu0 0.0
    %2253 = vmatpush1.msra.mxu0 0.0
    %2254 = vmatprep.subr.mxu0 0.0
    %2255 = vmatpush1.msra.mxu0 0.0
    %2256 = vmatprep.subr.mxu0 0.0
    %2257 = vmatpush1.msra.mxu0 0.0
    %2258 = vmatprep.subr.mxu0 0.0
    %2259 = vmatpush1.msra.mxu0 0.0
    %2260 = vmatprep.subr.mxu0 0.0
    %2261 = vmatpush1.msra.mxu0 0.0
    %2262 = vmatprep.subr.mxu0 0.0
    %2263 = vmatpush1.msra.mxu0 0.0
    %2264 = vmatprep.subr.mxu0 0.0
    %2265 = vmatpush1.msra.mxu0 0.0
    %2266 = vmatprep.subr.mxu0 0.0
    %2267 = vmatpush1.msra.mxu0 0.0
    %2268 = vmatprep.subr.mxu0 0.0
    %2269 = vmatpush1.msra.mxu0 0.0
    %2270 = vmatprep.subr.mxu0 0.0
    %2271 = vmatpush1.msra.mxu0 0.0
    %2272 = vmatprep.subr.mxu0 0.0
    %2273 = vmatpush1.msra.mxu0 0.0
    %2274 = vmatprep.subr.mxu0 0.0
    %2275 = vmatpush1.msra.mxu0 0.0
    %2276 = vmatprep.subr.mxu0 0.0
    %2277 = vmatpush1.msra.mxu0 0.0
    %2278 = vmatprep.subr.mxu0 0.0
    %2279 = vmatpush1.msra.mxu0 0.0
    %2280 = vmatprep.subr.mxu0 0.0
    %2281 = vmatpush1.msra.mxu0 0.0
    %2282 = vmatprep.subr.mxu0 0.0
    %2283 = vmatpush1.msra.mxu0 0.0
    %2284 = vmatprep.subr.mxu0 0.0
    %2285 = vmatpush1.msra.mxu0 0.0
    %2286 = vmatprep.subr.mxu0 0.0
    %2287 = vmatpush1.msra.mxu0 0.0
    %2288 = vmatprep.subr.mxu0 0.0
    %2289 = vmatpush1.msra.mxu0 0.0
    %2290 = vmatprep.subr.mxu0 0.0
    %2291 = vmatpush1.msra.mxu0 0.0
    %2292 = vmatprep.mubr.f32.mxu0 0.0
    %2293 = vmatmul.mubr.f32.gmra.mrb[0].mxu0 %v2226
    %v2294 = vpop.f32.mrb[0].mxu0
    %v2295 = vadd.f32 %v42, %v2294
    %v2296 = vpop.f32.mrb[0].mxu0
    %2297 = vdwg.mxu0
    %v2298 = vadd.f32 %v2220, %v2295
    %v2299 = vmul.f32 %v2298, 0.5
    %v2300 = vtanh.pop %v2299
    %v2301 = vmul.f32 %v2300, 0.5
    %v2302 = vadd.f32 %v2301, 0.5
    %2304 = vrot.lane.b32.xlu0 %v2295, 64
    %v2305 = vpop.permute.xlu0 %2304
    %v2307 = vmul.f32 %v2302, %v2305
    %2309 = vrot.lane.b32.xlu0 %v2307, 64
    %v2310 = vpop.permute.xlu0 %2309
    %v2312 = vadd.f32 %v2220, %v2310
    %v2313 = vtanh.pop %v2312
    %v2314 = vsub.f32 1.0, %v2302
    %2316 = vrot.lane.b32.xlu0 %v2313, 96
    %v2317 = vpop.permute.xlu0 %2316
    %v2319 = vmul.f32 %v2314, %v2317
    %v2320 = vmul.f32 %v2302, %v2146
    %v2321 = vadd.f32 %v2319, %v2320
    %2322 = vrot.lane.b32.xlu0 %v1977, 96
    %v2323 = vpop.permute.xlu0 %2322
    %vm2325 = vcmask 261126
    %2326 = vst.msk [vmem:[#allocation2 - $0x6] sm:$0xc0] %vm2325, %v2323
    %2328 = vrot.lane.b32.xlu0 %v2321, 96
    %v2329 = vpop.permute.xlu0 %2328
    %s2331 = scalar_lea.vmem [#allocation2], 2
    %vm2332 = vcmask 254976
    %2333 = vst.msk [vmem:[%s2331] sm:$0x3] %vm2332, %v2329
    // Predicated region
    $region14: #{tpu_custom_call.1} parent=1 // pred_check
      _
    $region15: #{tpu_custom_call.1} parent=1 // pred_check_branch
      %2335 = sbr.rel (0) target = $region17
    $region16: #{tpu_custom_call.1} parent=1 // pred_region
      %s2337 = ssub.s32 64, 64
      %2338 = vsyncadd [#allocation3], %s2337
      %s2339 = sshll.u32 [#allocation2], 4
      %s2340 = int_to_ptr.vmem [resolvable:$true] %s2339
      %2345 = dma.vmem_to_hbm [thread:$0]  %s2340, 64, %s3, [#allocation3], 32, 32, 2
    $region17: #{tpu_custom_call.1} parent=1 // pred_fallthru
      _
    // Predicated region
    $region18: #{tpu_custom_call.1} parent=1 // pred_check
      _
    $region19: #{tpu_custom_call.1} parent=1 // pred_check_branch
      %2347 = sbr.rel (0) target = $region21
    $region20: #{tpu_custom_call.1} parent=1 // pred_region
      %2348 = dma.done [#allocation3], 64
    $region21: #{tpu_custom_call.1} parent=1 // pred_fallthru
      _
    %2349 = vsyncpa [#allocation3], 1

</llo_original>
